<compile_context>
chip_gen: v6e
topology: v6e:2x2x1
jax: 0.10.0
libtpu: 0.0.40
codegen_flags: <defaults>
</compile_context>

<pallas_src>
import jax
import jax.numpy as jnp
from jax.experimental import pallas as pl
from jax.experimental.pallas import tpu as pltpu

LEAKY_SLOPE = 0.2
LANE = 128
VMEM_LIMIT = 32 * 1024 * 1024  # well above the <1 MiB working set, safe on v5e/v6e/v7x


def _round_up(x, m):
    return ((x + m - 1) // m) * m


def _leaky_relu(x):
    return jnp.where(x >= 0, x, LEAKY_SLOPE * x)


# --------------------------- fused Pallas kernel -------------------------------

def _fused_gcn_kernel(x_tile_ref, x_all_ref, ws_ref, wn_ref, a_ref, o_ref, h_ref):
    """One row tile of: normalize(lrelu(x@Ws + lrelu(A_mean @ (x@Wn))))."""
    # h_neigh = x @ W_neigh for ALL (padded) nodes, resident in VMEM scratch.
    # Recomputed per row tile (cheap O(N*Fin*Fout) vs the O(N^2*Fout) agg) so
    # every grid step is independent -> "parallel" megacore sharding on v7x.
    h_ref[...] = jnp.dot(x_all_ref[...], wn_ref[...],
                         preferred_element_type=jnp.float32).astype(h_ref.dtype)

    # src = lin_self(x) for this row tile (kept in f32).
    src = jnp.dot(x_tile_ref[...], ws_ref[...], preferred_element_type=jnp.float32)

    # Mean aggregation over neighbours + lin_neigh already folded into h:
    # neigh = LeakyReLU(A_tile @ h_neigh)
    neigh = _leaky_relu(jnp.dot(a_ref[...], h_ref[...],
                                preferred_element_type=jnp.float32))

    upd = _leaky_relu(src + neigh)                      # update_mode == 'sum'

    # F.normalize(p=2, dim=1): x / max(||x||, 1e-12); rsqrt hits the EUP slot.
    sumsq = jnp.sum(upd * upd, axis=1, keepdims=True)
    inv = jax.lax.rsqrt(jnp.maximum(sumsq, 1e-24))
    o_ref[...] = (upd * inv).astype(o_ref.dtype)


# ------------------------------ JAX glue ----------------------------------------

def build_mean_agg_matrix(edges, num_nodes, padded_nodes=None, dtype=jnp.float32):
    """scatter(node_fts[edges[1]], edges[0], reduce='mean') == A_mean @ node_fts.

    Built directly at the (padded) shape with 1/deg folded into the scatter,
    so no full-matrix divide, no pad-copy and no extra cast pass.
    """
    size = num_nodes if padded_nodes is None else padded_nodes
    tgt, src = edges[0], edges[1]
    deg = jnp.zeros((num_nodes,), jnp.float32).at[tgt].add(1.0)
    inv_deg = 1.0 / jnp.maximum(deg, 1.0)
    a = jnp.zeros((size, size), jnp.float32).at[tgt, src].add(inv_deg[tgt])
    return a.astype(dtype)


def xavier_uniform(key, fan_in, fan_out, gain=1.414):
    bound = gain * jnp.sqrt(6.0 / (fan_in + fan_out))
    # stored as [F_in, F_out] (transposed PyTorch layout) so the kernel does x @ W
    return jax.random.uniform(key, (fan_in, fan_out), jnp.float32,
                              minval=-bound, maxval=bound)


# ------------------------------ wrapper -----------------------------------------

def graph_convolution(node_fts, edges, w_self, w_neigh, *,
                      tm=128, compute_dtype=jnp.bfloat16):
    n, f_in = node_fts.shape
    f_out = w_self.shape[1]

    f_in_p = _round_up(f_in, LANE)
    f_out_p = _round_up(f_out, LANE)
    n_p = _round_up(n, tm)            # 384 for N=300 (no lcm inflation)
    grid_rows = n_p // tm             # 3 row tiles -> both v7x TensorCores get work
    cd = jnp.dtype(compute_dtype)

    # Zero-pad to lane-dense / tile-aligned shapes. Zeros are exact no-ops for
    # the matmuls, activations and the row-wise L2 norm; padded rows slice off.
    x_p = (jnp.zeros((n_p, f_in_p), compute_dtype)
           .at[:n, :f_in].set(node_fts.astype(compute_dtype)))
    ws_p = (jnp.zeros((f_in_p, f_out_p), compute_dtype)
            .at[:f_in, :f_out].set(w_self.astype(compute_dtype)))
    wn_p = (jnp.zeros((f_in_p, f_out_p), compute_dtype)
            .at[:f_in, :f_out].set(w_neigh.astype(compute_dtype)))
    a_p = build_mean_agg_matrix(edges, n, padded_nodes=n_p, dtype=compute_dtype)

    cost = pl.CostEstimate(
        flops=(grid_rows * 2 * n_p * f_in_p * f_out_p     # h_neigh per row tile
               + 2 * n_p * f_in_p * f_out_p               # src projection
               + 2 * n_p * n_p * f_out_p),                # A @ h_neigh
        transcendentals=n_p,                              # one rsqrt per row
        bytes_accessed=(n_p * f_in_p * cd.itemsize * (grid_rows + 1)
                        + 2 * f_in_p * f_out_p * cd.itemsize
                        + n_p * n_p * cd.itemsize
                        + n_p * f_out_p * 4))

    out_p = pl.pallas_call(
        _fused_gcn_kernel,
        out_shape=jax.ShapeDtypeStruct((n_p, f_out_p), jnp.float32),
        grid_spec=pltpu.PrefetchScalarGridSpec(
            num_scalar_prefetch=0,
            grid=(grid_rows,),
            in_specs=[
                pl.BlockSpec((tm, f_in_p), lambda i: (i, 0)),       # x rows of this tile
                pl.BlockSpec((n_p, f_in_p), lambda i: (0, 0)),      # x, resident
                pl.BlockSpec((f_in_p, f_out_p), lambda i: (0, 0)),  # W_self, resident
                pl.BlockSpec((f_in_p, f_out_p), lambda i: (0, 0)),  # W_neigh, resident
                pl.BlockSpec((tm, n_p), lambda i: (i, 0)),          # A row stripe
            ],
            out_specs=pl.BlockSpec((tm, f_out_p), lambda i: (i, 0)),
            scratch_shapes=[pltpu.VMEM((n_p, f_out_p), compute_dtype)],  # h_neigh
        ),
        compiler_params=pltpu.CompilerParams(
            dimension_semantics=("parallel",),
            vmem_limit_bytes=VMEM_LIMIT),
        cost_estimate=cost,
    )(x_p, x_p, ws_p, wn_p, a_p)

    return out_p[:n, :f_out]


# ------------------------------ reference ---------------------------------------

def reference_forward(node_fts, edges, w_self, w_neigh, compute_dtype=jnp.float32):
    n = node_fts.shape[0]
    a = build_mean_agg_matrix(edges, n).astype(compute_dtype)
    x = node_fts.astype(compute_dtype)
    ws = w_self.astype(compute_dtype)
    wn = w_neigh.astype(compute_dtype)
    src = jnp.dot(x, ws, preferred_element_type=jnp.float32)
    h = jnp.dot(x, wn, preferred_element_type=jnp.float32).astype(compute_dtype)
    neigh = _leaky_relu(jnp.dot(a, h, preferred_element_type=jnp.float32))
    upd = _leaky_relu(src + neigh)
    norm = jnp.maximum(jnp.sqrt(jnp.sum(upd * upd, axis=1, keepdims=True)), 1e-12)
    return upd / norm


# ------------------------------- main --------------------------------------------

if __name__ == "__main__":
    N = 300       # number of nodes
    F_IN = 48     # node_in_fts
    F_OUT = 40    # node_out_fts
    E = 900       # number of edges

    key = jax.random.PRNGKey(0)
    k_x, k_e, k_ws, k_wn = jax.random.split(key, 4)

    node_fts = jax.random.normal(k_x, (N, F_IN), jnp.float32)
    edges = jax.random.randint(k_e, (2, E), 0, N, jnp.int32)
    edge_fts = jax.random.normal(jax.random.PRNGKey(1), (E,), jnp.float32)
    # edge_fts is only used by the rnn/gru/lstm aggregation branch (not 'mean').
    # lin_pool exists in the module __init__ but is unused in this forward branch.

    # Parameters (xavier_uniform, gain=1.414), deterministic from PRNGKey(0)
    w_self = xavier_uniform(k_ws, F_IN, F_OUT)
    w_neigh = xavier_uniform(k_wn, F_IN, F_OUT)
    # TODO(synk): rnn/gru/lstm aggregation branch (pack_padded_sequence) has no
    # clean Pallas equivalent; only the 'mean' branch is implemented.

    out = graph_convolution(node_fts, edges, w_self, w_neigh)
    out = jax.block_until_ready(out)
    assert out.shape == (N, F_OUT)

    # Tight check vs a reference that mimics the kernel's bf16 MXU inputs.
    ref_bf16 = reference_forward(node_fts, edges, w_self, w_neigh,
                                 compute_dtype=jnp.bfloat16)
    assert jnp.allclose(out, ref_bf16, atol=5e-3, rtol=5e-3), \
        "mismatch vs bf16-matched reference"

    # Loose sanity check vs the full-precision reference (bf16 rounding noise).
    ref_f32 = reference_forward(node_fts, edges, w_self, w_neigh,
                                compute_dtype=jnp.float32)
    assert jnp.allclose(out, ref_f32, atol=3e-2, rtol=3e-2), \
        "mismatch vs f32 reference"

    print("KERNEL_OK")
</pallas_src>

<mosaic_0001>
module attributes {stable_mosaic.version = 11 : i64} {
  func.func @_fused_gcn_kernel(%arg0: i32, %arg1: memref<128x128xbf16, #tpu.memory_space<vmem>>, %arg2: memref<384x128xbf16, #tpu.memory_space<vmem>>, %arg3: memref<128x128xbf16, #tpu.memory_space<vmem>>, %arg4: memref<128x128xbf16, #tpu.memory_space<vmem>>, %arg5: memref<128x384xbf16, #tpu.memory_space<vmem>>, %arg6: memref<128x128xf32, #tpu.memory_space<vmem>>, %arg7: memref<384x128xbf16, #tpu.memory_space<vmem>>) attributes {dimension_semantics = [#tpu.dimension_semantics<parallel>], iteration_bounds = array<i64: 3>, scalar_prefetch = 0 : i64, scratch_operands = 1 : i64, tpu.core_type = #tpu.core_type<tc>, window_params = [{transform_indices = @transform_0, window_bounds = array<i64: 128, 128>}, {pipeline_mode = #tpu.pipeline_mode<synchronous>, transform_indices = @transform_1, window_bounds = array<i64: 384, 128>}, {pipeline_mode = #tpu.pipeline_mode<synchronous>, transform_indices = @transform_2, window_bounds = array<i64: 128, 128>}, {pipeline_mode = #tpu.pipeline_mode<synchronous>, transform_indices = @transform_3, window_bounds = array<i64: 128, 128>}, {transform_indices = @transform_4, window_bounds = array<i64: 128, 384>}, {transform_indices = @transform_5, window_bounds = array<i64: 128, 128>}]} {
    %c0 = arith.constant 0 : index
    %c0_0 = arith.constant 0 : index
    %0 = vector.load %arg2[%c0, %c0_0] : memref<384x128xbf16, #tpu.memory_space<vmem>>, vector<384x128xbf16>
    %c0_1 = arith.constant 0 : index
    %c0_2 = arith.constant 0 : index
    %1 = vector.load %arg4[%c0_1, %c0_2] : memref<128x128xbf16, #tpu.memory_space<vmem>>, vector<128x128xbf16>
    %cst = arith.constant dense<0.000000e+00> : vector<384x128xf32>
    %2 = tpu.matmul %0, %1, %cst {dimension_numbers = #tpu.dot_dimension_numbers<[1], [0], [0], [1], [0, 0, 1, 1], [], []>} : vector<384x128xbf16>, vector<128x128xbf16>, vector<384x128xf32> -> vector<384x128xf32>
    %3 = arith.truncf %2 : vector<384x128xf32> to vector<384x128xbf16>
    %c0_3 = arith.constant 0 : index
    %c0_4 = arith.constant 0 : index
    %4 = vector.load %arg7[%c0_3, %c0_4] : memref<384x128xbf16, #tpu.memory_space<vmem>>, vector<384x128xbf16>
    tpu.vector_store %arg7[%c0_3, %c0_4], %3 {strides = array<i32>} : memref<384x128xbf16, #tpu.memory_space<vmem>>, vector<384x128xbf16>,
    %c0_5 = arith.constant 0 : index
    %c0_6 = arith.constant 0 : index
    %5 = vector.load %arg1[%c0_5, %c0_6] : memref<128x128xbf16, #tpu.memory_space<vmem>>, vector<128x128xbf16>
    %c0_7 = arith.constant 0 : index
    %c0_8 = arith.constant 0 : index
    %6 = vector.load %arg3[%c0_7, %c0_8] : memref<128x128xbf16, #tpu.memory_space<vmem>>, vector<128x128xbf16>
    %cst_9 = arith.constant dense<0.000000e+00> : vector<128x128xf32>
    %7 = tpu.matmul %5, %6, %cst_9 {dimension_numbers = #tpu.dot_dimension_numbers<[1], [0], [0], [1], [0, 0, 1, 1], [], []>} : vector<128x128xbf16>, vector<128x128xbf16>, vector<128x128xf32> -> vector<128x128xf32>
    %c0_10 = arith.constant 0 : index
    %c0_11 = arith.constant 0 : index
    %8 = vector.load %arg5[%c0_10, %c0_11] : memref<128x384xbf16, #tpu.memory_space<vmem>>, vector<128x384xbf16>
    %c0_12 = arith.constant 0 : index
    %c0_13 = arith.constant 0 : index
    %9 = vector.load %arg7[%c0_12, %c0_13] : memref<384x128xbf16, #tpu.memory_space<vmem>>, vector<384x128xbf16>
    %cst_14 = arith.constant dense<0.000000e+00> : vector<128x128xf32>
    %10 = tpu.matmul %8, %9, %cst_14 {dimension_numbers = #tpu.dot_dimension_numbers<[1], [0], [0], [1], [0, 0, 1, 1], [], []>} : vector<128x384xbf16>, vector<384x128xbf16>, vector<128x128xf32> -> vector<128x128xf32>
    %cst_15 = arith.constant 0.000000e+00 : f32
    %11 = vector.broadcast %cst_15 : f32 to vector<128x128xf32>
    %12 = arith.cmpf oge, %10, %11 : vector<128x128xf32>
    %cst_16 = arith.constant 2.000000e-01 : f32
    %13 = vector.broadcast %cst_16 : f32 to vector<128x128xf32>
    %14 = arith.mulf %13, %10 : vector<128x128xf32>
    %15 = arith.select %12, %10, %14 : vector<128x128xi1>, vector<128x128xf32>
    %16 = arith.addf %7, %15 : vector<128x128xf32>
    %cst_17 = arith.constant 0.000000e+00 : f32
    %17 = vector.broadcast %cst_17 : f32 to vector<128x128xf32>
    %18 = arith.cmpf oge, %16, %17 : vector<128x128xf32>
    %cst_18 = arith.constant 2.000000e-01 : f32
    %19 = vector.broadcast %cst_18 : f32 to vector<128x128xf32>
    %20 = arith.mulf %19, %16 : vector<128x128xf32>
    %21 = arith.select %18, %16, %20 : vector<128x128xi1>, vector<128x128xf32>
    %22 = arith.mulf %21, %21 : vector<128x128xf32>
    %cst_19 = arith.constant dense<0.000000e+00> : vector<128xf32>
    %23 = vector.multi_reduction <add>, %22, %cst_19 [1] : vector<128x128xf32> to vector<128xf32>
    %24 = vector.shape_cast %23 : vector<128xf32> to vector<128x1xf32>
    %cst_20 = arith.constant 1.000000e-24 : f32
    %25 = vector.broadcast %cst_20 : f32 to vector<128x1xf32>
    %26 = arith.maximumf %24, %25 : vector<128x1xf32>
    %27 = math.rsqrt %26 : vector<128x1xf32>
    %28 = vector.broadcast %27 : vector<128x1xf32> to vector<128x128xf32>
    %29 = arith.mulf %21, %28 : vector<128x128xf32>
    %c0_21 = arith.constant 0 : index
    %c0_22 = arith.constant 0 : index
    %30 = vector.load %arg6[%c0_21, %c0_22] : memref<128x128xf32, #tpu.memory_space<vmem>>, vector<128x128xf32>
    tpu.vector_store %arg6[%c0_21, %c0_22], %29 {strides = array<i32>} : memref<128x128xf32, #tpu.memory_space<vmem>>, vector<128x128xf32>,
    return
  }
  func.func @transform_0(%arg0: i32) -> (i32, i32) {
    %c0_i32 = arith.constant 0 : i32
    %c0_i32_0 = arith.constant 0 : i32
    return %arg0, %c0_i32 : i32, i32
  }
  func.func @transform_1(%arg0: i32) -> (i32, i32) {
    %c0_i32 = arith.constant 0 : i32
    %c0_i32_0 = arith.constant 0 : i32
    %c0_i32_1 = arith.constant 0 : i32
    return %c0_i32, %c0_i32_0 : i32, i32
  }
  func.func @transform_2(%arg0: i32) -> (i32, i32) {
    %c0_i32 = arith.constant 0 : i32
    %c0_i32_0 = arith.constant 0 : i32
    %c0_i32_1 = arith.constant 0 : i32
    return %c0_i32, %c0_i32_0 : i32, i32
  }
  func.func @transform_3(%arg0: i32) -> (i32, i32) {
    %c0_i32 = arith.constant 0 : i32
    %c0_i32_0 = arith.constant 0 : i32
    %c0_i32_1 = arith.constant 0 : i32
    return %c0_i32, %c0_i32_0 : i32, i32
  }
  func.func @transform_4(%arg0: i32) -> (i32, i32) {
    %c0_i32 = arith.constant 0 : i32
    %c0_i32_0 = arith.constant 0 : i32
    return %arg0, %c0_i32 : i32, i32
  }
  func.func @transform_5(%arg0: i32) -> (i32, i32) {
    %c0_i32 = arith.constant 0 : i32
    %c0_i32_0 = arith.constant 0 : i32
    return %arg0, %c0_i32 : i32, i32
  }
}

</mosaic_0001>

<llo_original>
// kernel: tpu_custom_call.1
$region0: #{tpu_custom_call.1}
  #allocation0 [shape = 'u32[]', space=smem, size = 0x4, offset = 0x4, fixed_abs, tag = 'smem constant byte address 0x4 - core index']
  #allocation1 [shape = 'u32[144,128]{1,0:T(1,128)}', space=vmem, size = 0x12000, scoped, tag = 'internal scratch']
  #allocation2 [shape = 'bf16[384,128]{1,0:T(8,128)(2,1)}', space=vmem, size = 0x18000, scoped, tag = 'scratch operand']
  %s0 = inlined_call_operand.hbm [shape: bf16[384,128], index: 0, kind: input, shape index: {}]
  %s1 = inlined_call_operand.hbm [shape: bf16[384,128], index: 1, kind: input, shape index: {}]
  %s2 = inlined_call_operand.hbm [shape: bf16[128,128], index: 2, kind: input, shape index: {}]
  %s3 = inlined_call_operand.hbm [shape: bf16[128,128], index: 3, kind: input, shape index: {}]
  %s4 = inlined_call_operand.hbm [shape: bf16[384,384], index: 4, kind: input, shape index: {}]
  %s5 = inlined_call_operand.hbm [shape: f32[384,128], index: 5, kind: output, shape index: {}]
  %s6 = sld [smem:[#allocation0]]
  $region73: #{tpu_custom_call.1} parent=0
    _
  %s8 = ssub.s32 1, %s6
  %s9 = scalar_select 0, %s8, %s6
  $region1: #{tpu_custom_call.1} parent=0
    #allocation3 [shape = 'u8[65536]{0}', space=vmem, size = 0x10000, scoped, tag = 'input window, operand 0']
    #allocation4 [shape = 's32[2]{0}', space=sflag, size = 0x8, scoped, tag = 'scoped memory for tpu_custom_call.1']
    #allocation5 [shape = 's32[2]{0}', space=sflag, size = 0x8, scoped, tag = 'scoped memory for tpu_custom_call.1']
    #allocation6 [shape = 'u8[98304]{0}', space=vmem, size = 0x18000, scoped, tag = 'input window, operand 1, single buffered']
    #allocation7 [shape = 's32[1]{0}', space=sflag, size = 0x4, scoped, tag = 'scoped memory for tpu_custom_call.1']
    #allocation8 [shape = 'u8[32768]{0}', space=vmem, size = 0x8000, scoped, tag = 'input window, operand 2, single buffered']
    #allocation9 [shape = 'u8[32768]{0}', space=vmem, size = 0x8000, scoped, tag = 'input window, operand 3, single buffered']
    #allocation10 [shape = 's32[1]{0}', space=sflag, size = 0x4, scoped, tag = 'scoped memory for tpu_custom_call.1']
    #allocation11 [shape = 'u8[196608]{0}', space=vmem, size = 0x30000, scoped, tag = 'input window, operand 4']
    #allocation12 [shape = 'u8[131072]{0}', space=vmem, size = 0x20000, scoped, tag = 'output window, operand 0']
    %10 = vsyncpa [#allocation4], 0
    %s11 = scalar_lea.sflag [#allocation4], 1
    %12 = vsyncpa %s11, 0
    %13 = vsyncpa [#allocation7], 0
    %14 = vsyncpa [#allocation10], 0
    %15 = vsyncpa [#allocation5], 0
    %s16 = scalar_lea.sflag [#allocation5], 1
    %17 = vsyncpa %s16, 0
    loop: start=0, step=1, limit=5
    $region2: #{tpu_custom_call.1} parent=1 // loop_pre_header
      _
    $region3: #{tpu_custom_call.1} parent=1 // loop_header
      %s19 = sphi 0, %s23
      %p20 = scmp.ge.s32.totalorder %s19, 5
      %s29 = sphi 0, %s31
      %s32 = sphi 0, %s29
      %s33 = sphi 0, %s32
      %s49 = sphi 0, %s33
      %s53 = sphi 0, %s53
      %s55 = sphi 0, %s53
      %s56 = sphi 0, %s55
      %s70 = sphi 0, %s56
      %s74 = sphi 0, %s74
      %s76 = sphi 0, %s74
      %s77 = sphi 0, %s76
      %s91 = sphi 0, %s77
      %s95 = sphi 0, %s95
      %s97 = sphi 0, %s95
      %s98 = sphi 0, %s97
      %s112 = sphi 0, %s98
      %s118 = sphi 0, %s120
      %s121 = sphi 0, %s118
      %s122 = sphi 0, %s121
      %s138 = sphi 0, %s122
      %s144 = sphi 0, %s146
      %s147 = sphi 0, %s144
      %s148 = sphi 0, %s147
      %s164 = sphi 0, %s148
    $region4: #{tpu_custom_call.1} parent=1 // loop_header_branch
      %22 = sbr.rel (%p20) target = $region8
    $region5: #{tpu_custom_call.1} parent=1 // loop_body
      %s24 = ssub.s32 %s19, 1
      %s25 = ssub.s32 %s19, 2
      %s26 = sadd.s32 %s19, 1
      %s27 = ssub.s32 %s19, %s26
      %p28 = scmp.eq.s32.totalorder %s27, 0
      %s30 = sadd.s32 %s29, 1
      %s31 = scalar_select %p28, %s29, %s30
      %p34 = pneg %p28
      %p35 = scmp.eq.s32.totalorder %s19, 2
      %p36 = por %p34, %p35
      %p37 = scmp.ne.s32.totalorder %s29, %s32
      %p38 = scmp.eq.s32.totalorder %s19, 0
      %p39 = por %p37, %p38
      %p40 = scmp.ne.s32.totalorder %s29, %s32
      %p41 = scmp.eq.s32.totalorder %s24, 2
      %p42 = por %p40, %p41
      %p43 = scmp.ne.s32.totalorder %s32, %s33
      %p44 = scmp.eq.s32.totalorder %s24, 0
      %p45 = por %p43, %p44
      %p46 = scmp.ne.s32.totalorder %s32, %s33
      %p47 = scmp.eq.s32.totalorder %s25, 2
      %p48 = por %p46, %p47
      %p50 = scmp.ne.s32.totalorder %s33, %s49
      %p51 = scmp.eq.s32.totalorder %s25, 0
      %p52 = por %p50, %p51
      %s54 = sadd.s32 %s53, 1
      %p57 = scmp.eq.s32.totalorder %s19, 2
      %p58 = scmp.ne.s32.totalorder %s53, %s55
      %p59 = scmp.eq.s32.totalorder %s19, 0
      %p60 = por %p58, %p59
      %p61 = scmp.ne.s32.totalorder %s53, %s55
      %p62 = scmp.eq.s32.totalorder %s24, 2
      %p63 = por %p61, %p62
      %p64 = scmp.ne.s32.totalorder %s55, %s56
      %p65 = scmp.eq.s32.totalorder %s24, 0
      %p66 = por %p64, %p65
      %p67 = scmp.ne.s32.totalorder %s55, %s56
      %p68 = scmp.eq.s32.totalorder %s25, 2
      %p69 = por %p67, %p68
      %p71 = scmp.ne.s32.totalorder %s56, %s70
      %p72 = scmp.eq.s32.totalorder %s25, 0
      %p73 = por %p71, %p72
      %s75 = sadd.s32 %s74, 1
      %p78 = scmp.eq.s32.totalorder %s19, 2
      %p79 = scmp.ne.s32.totalorder %s74, %s76
      %p80 = scmp.eq.s32.totalorder %s19, 0
      %p81 = por %p79, %p80
      %p82 = scmp.ne.s32.totalorder %s74, %s76
      %p83 = scmp.eq.s32.totalorder %s24, 2
      %p84 = por %p82, %p83
      %p85 = scmp.ne.s32.totalorder %s76, %s77
      %p86 = scmp.eq.s32.totalorder %s24, 0
      %p87 = por %p85, %p86
      %p88 = scmp.ne.s32.totalorder %s76, %s77
      %p89 = scmp.eq.s32.totalorder %s25, 2
      %p90 = por %p88, %p89
      %p92 = scmp.ne.s32.totalorder %s77, %s91
      %p93 = scmp.eq.s32.totalorder %s25, 0
      %p94 = por %p92, %p93
      %s96 = sadd.s32 %s95, 1
      %p99 = scmp.eq.s32.totalorder %s19, 2
      %p100 = scmp.ne.s32.totalorder %s95, %s97
      %p101 = scmp.eq.s32.totalorder %s19, 0
      %p102 = por %p100, %p101
      %p103 = scmp.ne.s32.totalorder %s95, %s97
      %p104 = scmp.eq.s32.totalorder %s24, 2
      %p105 = por %p103, %p104
      %p106 = scmp.ne.s32.totalorder %s97, %s98
      %p107 = scmp.eq.s32.totalorder %s24, 0
      %p108 = por %p106, %p107
      %p109 = scmp.ne.s32.totalorder %s97, %s98
      %p110 = scmp.eq.s32.totalorder %s25, 2
      %p111 = por %p109, %p110
      %p113 = scmp.ne.s32.totalorder %s98, %s112
      %p114 = scmp.eq.s32.totalorder %s25, 0
      %p115 = por %p113, %p114
      %s116 = ssub.s32 %s19, %s26
      %p117 = scmp.eq.s32.totalorder %s116, 0
      %s119 = sadd.s32 %s118, 1
      %s120 = scalar_select %p117, %s118, %s119
      %p123 = pneg %p117
      %p124 = scmp.eq.s32.totalorder %s19, 2
      %p125 = por %p123, %p124
      %p126 = scmp.ne.s32.totalorder %s118, %s121
      %p127 = scmp.eq.s32.totalorder %s19, 0
      %p128 = por %p126, %p127
      %p129 = scmp.ne.s32.totalorder %s118, %s121
      %p130 = scmp.eq.s32.totalorder %s24, 2
      %p131 = por %p129, %p130
      %p132 = scmp.ne.s32.totalorder %s121, %s122
      %p133 = scmp.eq.s32.totalorder %s24, 0
      %p134 = por %p132, %p133
      %p135 = scmp.ne.s32.totalorder %s121, %s122
      %p136 = scmp.eq.s32.totalorder %s25, 2
      %p137 = por %p135, %p136
      %p139 = scmp.ne.s32.totalorder %s122, %s138
      %p140 = scmp.eq.s32.totalorder %s25, 0
      %p141 = por %p139, %p140
      %s142 = ssub.s32 %s19, %s26
      %p143 = scmp.eq.s32.totalorder %s142, 0
      %s145 = sadd.s32 %s144, 1
      %s146 = scalar_select %p143, %s144, %s145
      %p149 = pneg %p143
      %p150 = scmp.eq.s32.totalorder %s19, 2
      %p151 = por %p149, %p150
      %p152 = scmp.ne.s32.totalorder %s144, %s147
      %p153 = scmp.eq.s32.totalorder %s19, 0
      %p154 = por %p152, %p153
      %p155 = scmp.ne.s32.totalorder %s144, %s147
      %p156 = scmp.eq.s32.totalorder %s24, 2
      %p157 = por %p155, %p156
      %p158 = scmp.ne.s32.totalorder %s147, %s148
      %p159 = scmp.eq.s32.totalorder %s24, 0
      %p160 = por %p158, %p159
      %p161 = scmp.ne.s32.totalorder %s147, %s148
      %p162 = scmp.eq.s32.totalorder %s25, 2
      %p163 = por %p161, %p162
      %p165 = scmp.ne.s32.totalorder %s148, %s164
      %p166 = scmp.eq.s32.totalorder %s25, 0
      %p167 = por %p165, %p166
      %p168 = scmp.le.s32.totalorder 1, %s19
      %p169 = scmp.lt.s32.totalorder %s19, 4
      %p170 = pnand %p168, %p169
      %p171 = pneg %p170
      // Predicated region
      $region9: #{tpu_custom_call.1} parent=5 // pred_check
        _
      $region10: #{tpu_custom_call.1} parent=5 // pred_check_branch
        %173 = sbr.rel (%p170) target = $region12
      $region11: #{tpu_custom_call.1} parent=5 // pred_region
        %s174 = ssub.s32 %s19, 1
        // Predicated region
        $region13: #{tpu_custom_call.1} parent=11 // pred_check
          %p175 = pneg %p66
        $region14: #{tpu_custom_call.1} parent=11 // pred_check_branch
          %177 = sbr.rel (%p175) target = $region16
        $region15: #{tpu_custom_call.1} parent=11 // pred_region
          %s179 = ssub.s32 3072, 3072
          %180 = vsyncadd [#allocation7], %s179
          %s181 = sshll.u32 [#allocation6], 4
          %s182 = int_to_ptr.vmem [resolvable:$true] %s181
          %187 = dma.hbm_to_vmem [thread:$0]  %s1, 3072, %s182, [#allocation7], 64, 64, 4
        $region16: #{tpu_custom_call.1} parent=11 // pred_fallthru
          _
        // Predicated region
        $region17: #{tpu_custom_call.1} parent=11 // pred_check
          %p188 = pneg %p87
        $region18: #{tpu_custom_call.1} parent=11 // pred_check_branch
          %190 = sbr.rel (%p188) target = $region20
        $region19: #{tpu_custom_call.1} parent=11 // pred_region
          %s192 = ssub.s32 1024, 1024
          %193 = vsyncadd [#allocation7], %s192
          %s194 = sshll.u32 [#allocation8], 4
          %s195 = int_to_ptr.vmem [resolvable:$true] %s194
          %200 = dma.hbm_to_vmem [thread:$0]  %s2, 1024, %s195, [#allocation7], 64, 64, 4
        $region20: #{tpu_custom_call.1} parent=11 // pred_fallthru
          _
        // Predicated region
        $region21: #{tpu_custom_call.1} parent=11 // pred_check
          %p201 = pneg %p108
        $region22: #{tpu_custom_call.1} parent=11 // pred_check_branch
          %203 = sbr.rel (%p201) target = $region24
        $region23: #{tpu_custom_call.1} parent=11 // pred_region
          %s205 = ssub.s32 1024, 1024
          %206 = vsyncadd [#allocation10], %s205
          %s207 = sshll.u32 [#allocation9], 4
          %s208 = int_to_ptr.vmem [resolvable:$true] %s207
          %213 = dma.hbm_to_vmem [thread:$0]  %s3, 1024, %s208, [#allocation10], 64, 64, 4
        $region24: #{tpu_custom_call.1} parent=11 // pred_fallthru
          _
      $region12: #{tpu_custom_call.1} parent=5 // pred_fallthru
        _
      %p214 = scmp.lt.s32.totalorder %s19, 3
      // Predicated region
      $region25: #{tpu_custom_call.1} parent=5 // pred_check
        %p215 = pneg %p214
      $region26: #{tpu_custom_call.1} parent=5 // pred_check_branch
        %217 = sbr.rel (%p215) target = $region28
      $region27: #{tpu_custom_call.1} parent=5 // pred_region
        // Predicated region
        $region29: #{tpu_custom_call.1} parent=27 // pred_check
          %p218 = pneg %p39
        $region30: #{tpu_custom_call.1} parent=27 // pred_check_branch
          %220 = sbr.rel (%p218) target = $region32
        $region31: #{tpu_custom_call.1} parent=27 // pred_region
          %s221 = sand.u32 %s19, 1
          %s222 = scalar_lea.sflag [#allocation4], %s221
          %s223 = sand.u32 %s29, 1
          %s224 = smul.addr %s223, 64
          %s225 = scalar_lea.vmem [#allocation3], %s224
          %s226 = smul.u32 16, %s19
          %s228 = ssub.s32 1024, 1024
          %229 = vsyncadd %s222, %s228
          %s230 = smul.addr %s226, 64
          %s231 = scalar_lea.hbm %s0, %s230
          %s232 = sshll.u32 %s225, 4
          %s233 = int_to_ptr.vmem [resolvable:$true] %s232
          %238 = dma.hbm_to_vmem [thread:$0]  %s231, 1024, %s233, %s222, 64, 64, 4
        $region32: #{tpu_custom_call.1} parent=27 // pred_fallthru
          _
        // Predicated region
        $region33: #{tpu_custom_call.1} parent=27 // pred_check
          %p239 = pneg %p128
        $region34: #{tpu_custom_call.1} parent=27 // pred_check_branch
          %241 = sbr.rel (%p239) target = $region36
        $region35: #{tpu_custom_call.1} parent=27 // pred_region
          %s242 = sand.u32 %s19, 1
          %s243 = scalar_lea.sflag [#allocation4], %s242
          %s244 = sand.u32 %s118, 1
          %s245 = smul.addr %s244, 192
          %s246 = scalar_lea.vmem [#allocation11], %s245
          %s247 = smul.u32 16, %s19
          %s249 = ssub.s32 3072, 3072
          %250 = vsyncadd %s243, %s249
          %s251 = smul.addr %s247, 3
          %s252 = smul.addr %s251, 64
          %s253 = scalar_lea.hbm %s4, %s252
          %s254 = sshll.u32 %s246, 4
          %s255 = int_to_ptr.vmem [resolvable:$true] %s254
          %260 = dma.hbm_to_vmem [thread:$0]  %s253, 3072, %s255, %s243, 192, 192, 12
        $region36: #{tpu_custom_call.1} parent=27 // pred_fallthru
          _
      $region28: #{tpu_custom_call.1} parent=5 // pred_fallthru
        _
      %p261 = scmp.le.s32.totalorder 1, %s19
      %p262 = scmp.lt.s32.totalorder %s19, 4
      %p263 = pnand %p261, %p262
      %p264 = pneg %p263
      // Predicated region
      $region37: #{tpu_custom_call.1} parent=5 // pred_check
        _
      $region38: #{tpu_custom_call.1} parent=5 // pred_check_branch
        %266 = sbr.rel (%p263) target = $region40
      $region39: #{tpu_custom_call.1} parent=5 // pred_region
        %s267 = ssub.s32 %s19, 1
        %s268 = sand.u32 %s24, 1
        %s269 = scalar_lea.sflag [#allocation4], %s268
        %s270 = sand.u32 %s32, 1
        %s271 = smul.addr %s270, 64
        %s272 = scalar_lea.vmem [#allocation3], %s271
        // Predicated region
        $region41: #{tpu_custom_call.1} parent=39 // pred_check
          %p273 = pneg %p45
        $region42: #{tpu_custom_call.1} parent=39 // pred_check_branch
          %275 = sbr.rel (%p273) target = $region44
        $region43: #{tpu_custom_call.1} parent=39 // pred_region
          %276 = dma.done %s269, 1024
        $region44: #{tpu_custom_call.1} parent=39 // pred_fallthru
          _
        // Predicated region
        $region45: #{tpu_custom_call.1} parent=39 // pred_check
          %p277 = pneg %p66
        $region46: #{tpu_custom_call.1} parent=39 // pred_check_branch
          %279 = sbr.rel (%p277) target = $region48
        $region47: #{tpu_custom_call.1} parent=39 // pred_region
          %280 = dma.done [#allocation7], 3072
        $region48: #{tpu_custom_call.1} parent=39 // pred_fallthru
          _
        // Predicated region
        $region49: #{tpu_custom_call.1} parent=39 // pred_check
          %p281 = pneg %p87
        $region50: #{tpu_custom_call.1} parent=39 // pred_check_branch
          %283 = sbr.rel (%p281) target = $region52
        $region51: #{tpu_custom_call.1} parent=39 // pred_region
          %284 = dma.done [#allocation7], 1024
        $region52: #{tpu_custom_call.1} parent=39 // pred_fallthru
          _
        // Predicated region
        $region53: #{tpu_custom_call.1} parent=39 // pred_check
          %p285 = pneg %p108
        $region54: #{tpu_custom_call.1} parent=39 // pred_check_branch
          %287 = sbr.rel (%p285) target = $region56
        $region55: #{tpu_custom_call.1} parent=39 // pred_region
          %288 = dma.done [#allocation10], 1024
        $region56: #{tpu_custom_call.1} parent=39 // pred_fallthru
          _
        %s289 = sand.u32 %s24, 1
        %s290 = scalar_lea.sflag [#allocation4], %s289
        %s291 = sand.u32 %s121, 1
        %s292 = smul.addr %s291, 192
        %s293 = scalar_lea.vmem [#allocation11], %s292
        // Predicated region
        $region57: #{tpu_custom_call.1} parent=39 // pred_check
          %p294 = pneg %p134
        $region58: #{tpu_custom_call.1} parent=39 // pred_check_branch
          %296 = sbr.rel (%p294) target = $region60
        $region59: #{tpu_custom_call.1} parent=39 // pred_region
          %297 = dma.done %s290, 3072
        $region60: #{tpu_custom_call.1} parent=39 // pred_fallthru
          _
        %s298 = sand.u32 %s24, 1
        %s299 = scalar_lea.sflag [#allocation4], %s298
        %s300 = sand.u32 %s32, 1
        %s301 = smul.addr %s300, 64
        %s302 = scalar_lea.vmem [#allocation3], %s301
        %p303 = pneg %p45
        %p304 = pneg %p42
        %p305 = pneg %p66
        %p306 = pneg %p63
        %p307 = pneg %p87
        %p308 = pneg %p84
        %p309 = pneg %p108
        %p310 = pneg %p105
        %s311 = sand.u32 %s24, 1
        %s312 = scalar_lea.sflag [#allocation4], %s311
        %s313 = sand.u32 %s121, 1
        %s314 = smul.addr %s313, 192
        %s315 = scalar_lea.vmem [#allocation11], %s314
        %p316 = pneg %p134
        %p317 = pneg %p131
        %p318 = pneg %p160
        %p319 = pneg %p157
        %s320 = sand.u32 %s147, 1
        %s321 = scalar_lea.sflag [#allocation5], %s320
        %s322 = sand.u32 %s147, 1
        %s323 = smul.addr %s322, 128
        %s324 = scalar_lea.vmem [#allocation12], %s323
        %s325 = smul.u32 16, %s24
        %s326 = smul.u32 16, %s24
        %s327 = smul.u32 16, %s24
        %v329 = vld [vmem:[#allocation6] sm:$0xf]
        %v330 = vld [vmem:[#allocation6 + $0x4] sm:$0xf]
        %v331 = vld [vmem:[#allocation6 + $0x8] sm:$0xf]
        %v332 = vld [vmem:[#allocation6 + $0xc] sm:$0xf]
        %v333 = vld [vmem:[#allocation6 + $0x10] sm:$0xf]
        %v334 = vld [vmem:[#allocation6 + $0x14] sm:$0xf]
        %v335 = vld [vmem:[#allocation6 + $0x18] sm:$0xf]
        %v336 = vld [vmem:[#allocation6 + $0x1c] sm:$0xf]
        %v337 = vld [vmem:[#allocation6 + $0x20] sm:$0xf]
        %v338 = vld [vmem:[#allocation6 + $0x24] sm:$0xf]
        %v339 = vld [vmem:[#allocation6 + $0x28] sm:$0xf]
        %v340 = vld [vmem:[#allocation6 + $0x2c] sm:$0xf]
        %v341 = vld [vmem:[#allocation6 + $0x30] sm:$0xf]
        %v342 = vld [vmem:[#allocation6 + $0x34] sm:$0xf]
        %v343 = vld [vmem:[#allocation6 + $0x38] sm:$0xf]
        %v344 = vld [vmem:[#allocation6 + $0x3c] sm:$0xf]
        %v345 = vld [vmem:[#allocation6 + $0x40] sm:$0xf]
        %v346 = vld [vmem:[#allocation6 + $0x44] sm:$0xf]
        %v347 = vld [vmem:[#allocation6 + $0x48] sm:$0xf]
        %v348 = vld [vmem:[#allocation6 + $0x4c] sm:$0xf]
        %v349 = vld [vmem:[#allocation6 + $0x50] sm:$0xf]
        %v350 = vld [vmem:[#allocation6 + $0x54] sm:$0xf]
        %v351 = vld [vmem:[#allocation6 + $0x58] sm:$0xf]
        %v352 = vld [vmem:[#allocation6 + $0x5c] sm:$0xf]
        %v353 = vld [vmem:[#allocation6 + $0x60] sm:$0xf]
        %v354 = vld [vmem:[#allocation6 + $0x64] sm:$0xf]
        %v355 = vld [vmem:[#allocation6 + $0x68] sm:$0xf]
        %v356 = vld [vmem:[#allocation6 + $0x6c] sm:$0xf]
        %v357 = vld [vmem:[#allocation6 + $0x70] sm:$0xf]
        %v358 = vld [vmem:[#allocation6 + $0x74] sm:$0xf]
        %v359 = vld [vmem:[#allocation6 + $0x78] sm:$0xf]
        %v360 = vld [vmem:[#allocation6 + $0x7c] sm:$0xf]
        %v361 = vld [vmem:[#allocation6 + $0x80] sm:$0xf]
        %v362 = vld [vmem:[#allocation6 + $0x84] sm:$0xf]
        %v363 = vld [vmem:[#allocation6 + $0x88] sm:$0xf]
        %v364 = vld [vmem:[#allocation6 + $0x8c] sm:$0xf]
        %v365 = vld [vmem:[#allocation6 + $0x90] sm:$0xf]
        %v366 = vld [vmem:[#allocation6 + $0x94] sm:$0xf]
        %v367 = vld [vmem:[#allocation6 + $0x98] sm:$0xf]
        %v368 = vld [vmem:[#allocation6 + $0x9c] sm:$0xf]
        %v369 = vld [vmem:[#allocation6 + $0xa0] sm:$0xf]
        %v370 = vld [vmem:[#allocation6 + $0xa4] sm:$0xf]
        %v371 = vld [vmem:[#allocation6 + $0xa8] sm:$0xf]
        %v372 = vld [vmem:[#allocation6 + $0xac] sm:$0xf]
        %v373 = vld [vmem:[#allocation6 + $0xb0] sm:$0xf]
        %v374 = vld [vmem:[#allocation6 + $0xb4] sm:$0xf]
        %v375 = vld [vmem:[#allocation6 + $0xb8] sm:$0xf]
        %v376 = vld [vmem:[#allocation6 + $0xbc] sm:$0xf]
        %v377 = vld [vmem:[#allocation9] sm:$0xf]
        %v378 = vld [vmem:[#allocation9 + $0x4] sm:$0xf]
        %v379 = vld [vmem:[#allocation9 + $0x8] sm:$0xf]
        %v380 = vld [vmem:[#allocation9 + $0xc] sm:$0xf]
        %v381 = vld [vmem:[#allocation9 + $0x10] sm:$0xf]
        %v382 = vld [vmem:[#allocation9 + $0x14] sm:$0xf]
        %v383 = vld [vmem:[#allocation9 + $0x18] sm:$0xf]
        %v384 = vld [vmem:[#allocation9 + $0x1c] sm:$0xf]
        %v385 = vld [vmem:[#allocation9 + $0x20] sm:$0xf]
        %v386 = vld [vmem:[#allocation9 + $0x24] sm:$0xf]
        %v387 = vld [vmem:[#allocation9 + $0x28] sm:$0xf]
        %v388 = vld [vmem:[#allocation9 + $0x2c] sm:$0xf]
        %v389 = vld [vmem:[#allocation9 + $0x30] sm:$0xf]
        %v390 = vld [vmem:[#allocation9 + $0x34] sm:$0xf]
        %v391 = vld [vmem:[#allocation9 + $0x38] sm:$0xf]
        %v392 = vld [vmem:[#allocation9 + $0x3c] sm:$0xf]
        %v441 = vunpack.c.l.b16 %v329
        %v442 = vunpack.c.l.b16 %v330
        %v443 = vunpack.c.l.b16 %v331
        %v444 = vunpack.c.l.b16 %v332
        %v445 = vunpack.c.l.b16 %v333
        %v446 = vunpack.c.l.b16 %v334
        %v447 = vunpack.c.l.b16 %v335
        %v448 = vunpack.c.l.b16 %v336
        %v449 = vunpack.c.l.b16 %v337
        %v450 = vunpack.c.l.b16 %v338
        %v451 = vunpack.c.l.b16 %v339
        %v452 = vunpack.c.l.b16 %v340
        %v453 = vunpack.c.l.b16 %v341
        %v454 = vunpack.c.l.b16 %v342
        %v455 = vunpack.c.l.b16 %v343
        %v456 = vunpack.c.l.b16 %v344
        %v457 = vunpack.c.l.b16 %v345
        %v458 = vunpack.c.l.b16 %v346
        %v459 = vunpack.c.l.b16 %v347
        %v460 = vunpack.c.l.b16 %v348
        %v461 = vunpack.c.l.b16 %v349
        %v462 = vunpack.c.l.b16 %v350
        %v463 = vunpack.c.l.b16 %v351
        %v464 = vunpack.c.l.b16 %v352
        %v465 = vunpack.c.l.b16 %v353
        %v466 = vunpack.c.l.b16 %v354
        %v467 = vunpack.c.l.b16 %v355
        %v468 = vunpack.c.l.b16 %v356
        %v469 = vunpack.c.l.b16 %v357
        %v470 = vunpack.c.l.b16 %v358
        %v471 = vunpack.c.l.b16 %v359
        %v472 = vunpack.c.l.b16 %v360
        %v473 = vunpack.c.l.b16 %v361
        %v474 = vunpack.c.l.b16 %v362
        %v475 = vunpack.c.l.b16 %v363
        %v476 = vunpack.c.l.b16 %v364
        %v477 = vunpack.c.l.b16 %v365
        %v478 = vunpack.c.l.b16 %v366
        %v479 = vunpack.c.l.b16 %v367
        %v480 = vunpack.c.l.b16 %v368
        %v481 = vunpack.c.l.b16 %v369
        %v482 = vunpack.c.l.b16 %v370
        %v483 = vunpack.c.l.b16 %v371
        %v484 = vunpack.c.l.b16 %v372
        %v485 = vunpack.c.l.b16 %v373
        %v486 = vunpack.c.l.b16 %v374
        %v487 = vunpack.c.l.b16 %v375
        %v488 = vunpack.c.l.b16 %v376
        %v489 = vpack.c.b16 %v442, %v441
        %v490 = vpack.c.b16 %v444, %v443
        %v491 = vpack.c.b16 %v446, %v445
        %v492 = vpack.c.b16 %v448, %v447
        %v493 = vpack.c.b16 %v450, %v449
        %v494 = vpack.c.b16 %v452, %v451
        %v495 = vpack.c.b16 %v454, %v453
        %v496 = vpack.c.b16 %v456, %v455
        %v497 = vpack.c.b16 %v458, %v457
        %v498 = vpack.c.b16 %v460, %v459
        %v499 = vpack.c.b16 %v462, %v461
        %v500 = vpack.c.b16 %v464, %v463
        %v501 = vpack.c.b16 %v466, %v465
        %v502 = vpack.c.b16 %v468, %v467
        %v503 = vpack.c.b16 %v470, %v469
        %v504 = vpack.c.b16 %v472, %v471
        %v505 = vpack.c.b16 %v474, %v473
        %v506 = vpack.c.b16 %v476, %v475
        %v507 = vpack.c.b16 %v478, %v477
        %v508 = vpack.c.b16 %v480, %v479
        %v509 = vpack.c.b16 %v482, %v481
        %v510 = vpack.c.b16 %v484, %v483
        %v511 = vpack.c.b16 %v486, %v485
        %v512 = vpack.c.b16 %v488, %v487
        %v553 = vunpack.c.l.b16 %v377
        %v554 = vunpack.c.l.b16 %v378
        %v555 = vunpack.c.l.b16 %v379
        %v556 = vunpack.c.l.b16 %v380
        %v557 = vunpack.c.l.b16 %v381
        %v558 = vunpack.c.l.b16 %v382
        %v559 = vunpack.c.l.b16 %v383
        %v560 = vunpack.c.l.b16 %v384
        %v561 = vunpack.c.l.b16 %v385
        %v562 = vunpack.c.l.b16 %v386
        %v563 = vunpack.c.l.b16 %v387
        %v564 = vunpack.c.l.b16 %v388
        %v565 = vunpack.c.l.b16 %v389
        %v566 = vunpack.c.l.b16 %v390
        %v567 = vunpack.c.l.b16 %v391
        %v568 = vunpack.c.l.b16 %v392
        %v569 = vpack.c.b16 %v554, %v553
        %v570 = vpack.c.b16 %v556, %v555
        %v571 = vpack.c.b16 %v558, %v557
        %v572 = vpack.c.b16 %v560, %v559
        %v573 = vpack.c.b16 %v562, %v561
        %v574 = vpack.c.b16 %v564, %v563
        %v575 = vpack.c.b16 %v566, %v565
        %v576 = vpack.c.b16 %v568, %v567
        %585 = vmatprep.subr.bf16.mxu0 0
        %586 = vmatpush1.bf16.msra.mxu0 %v576
        %587 = vmatprep.subr.bf16.mxu0 0
        %588 = vmatpush1.bf16.msra.mxu0 %v575
        %589 = vmatprep.subr.bf16.mxu0 0
        %590 = vmatpush1.bf16.msra.mxu0 %v574
        %591 = vmatprep.subr.bf16.mxu0 0
        %592 = vmatpush1.bf16.msra.mxu0 %v573
        %593 = vmatprep.subr.bf16.mxu0 0
        %594 = vmatpush1.bf16.msra.mxu0 %v572
        %595 = vmatprep.subr.bf16.mxu0 0
        %596 = vmatpush1.bf16.msra.mxu0 %v571
        %597 = vmatprep.subr.bf16.mxu0 0
        %598 = vmatpush1.bf16.msra.mxu0 %v570
        %599 = vmatprep.subr.bf16.mxu0 0
        %600 = vmatpush1.bf16.msra.mxu0 %v569
        %601 = vmatprep.subr.bf16.mxu0 0
        %602 = vmatpush2.bf16.msra.mxu0 0
        %603 = vmatprep.subr.bf16.mxu0 0
        %604 = vmatpush2.bf16.msra.mxu0 0
        %605 = vmatprep.subr.bf16.mxu0 0
        %606 = vmatpush2.bf16.msra.mxu0 0
        %607 = vmatprep.subr.bf16.mxu0 0
        %608 = vmatpush2.bf16.msra.mxu0 0
        %609 = vmatprep.subr.bf16.mxu0 0
        %610 = vmatpush2.bf16.msra.mxu0 0
        %611 = vmatprep.subr.bf16.mxu0 0
        %612 = vmatpush2.bf16.msra.mxu0 0
        %613 = vmatprep.subr.bf16.mxu0 0
        %614 = vmatpush2.bf16.msra.mxu0 0
        %615 = vmatprep.subr.bf16.mxu0 0
        %616 = vmatpush2.bf16.msra.mxu0 0
        %617 = vmatprep.mubr.bf16.mxu0 0
        %618 = vmatmul.mubr.bf16.gmra.mxu0 %v489
        %v619 = vpop.f32.mrf.mxu0
        %v620 = vadd.f32 0.0, %v619
        %v621 = vpop.f32.mrf.mxu0
        %v622 = vpop.f32.mrf.mxu0
        %v623 = vadd.f32 0.0, %v622
        %v624 = vpop.f32.mrf.mxu0
        %625 = vmatprep.mubr.bf16.mxu0 0
        %626 = vmatmul.mubr.bf16.gmra.mxu0 %v490
        %v627 = vpop.f32.mrf.mxu0
        %v628 = vadd.f32 0.0, %v627
        %v629 = vpop.f32.mrf.mxu0
        %v630 = vpop.f32.mrf.mxu0
        %v631 = vadd.f32 0.0, %v630
        %v632 = vpop.f32.mrf.mxu0
        %633 = vmatprep.mubr.bf16.mxu0 0
        %634 = vmatmul.mubr.bf16.gmra.mxu0 %v491
        %v635 = vpop.f32.mrf.mxu0
        %v636 = vadd.f32 0.0, %v635
        %v637 = vpop.f32.mrf.mxu0
        %v638 = vpop.f32.mrf.mxu0
        %v639 = vadd.f32 0.0, %v638
        %v640 = vpop.f32.mrf.mxu0
        %641 = vmatprep.mubr.bf16.mxu0 0
        %642 = vmatmul.mubr.bf16.gmra.mxu0 %v492
        %v643 = vpop.f32.mrf.mxu0
        %v644 = vadd.f32 0.0, %v643
        %v645 = vpop.f32.mrf.mxu0
        %v646 = vpop.f32.mrf.mxu0
        %v647 = vadd.f32 0.0, %v646
        %v648 = vpop.f32.mrf.mxu0
        %649 = vmatprep.mubr.bf16.mxu0 0
        %650 = vmatmul.mubr.bf16.gmra.mxu0 %v493
        %v651 = vpop.f32.mrf.mxu0
        %v652 = vadd.f32 0.0, %v651
        %v653 = vpop.f32.mrf.mxu0
        %v654 = vpop.f32.mrf.mxu0
        %v655 = vadd.f32 0.0, %v654
        %v656 = vpop.f32.mrf.mxu0
        %657 = vmatprep.mubr.bf16.mxu0 0
        %658 = vmatmul.mubr.bf16.gmra.mxu0 %v494
        %v659 = vpop.f32.mrf.mxu0
        %v660 = vadd.f32 0.0, %v659
        %v661 = vpop.f32.mrf.mxu0
        %v662 = vpop.f32.mrf.mxu0
        %v663 = vadd.f32 0.0, %v662
        %v664 = vpop.f32.mrf.mxu0
        %665 = vmatprep.mubr.bf16.mxu0 0
        %666 = vmatmul.mubr.bf16.gmra.mxu0 %v495
        %v667 = vpop.f32.mrf.mxu0
        %v668 = vadd.f32 0.0, %v667
        %v669 = vpop.f32.mrf.mxu0
        %v670 = vpop.f32.mrf.mxu0
        %v671 = vadd.f32 0.0, %v670
        %v672 = vpop.f32.mrf.mxu0
        %673 = vmatprep.mubr.bf16.mxu0 0
        %674 = vmatmul.mubr.bf16.gmra.mxu0 %v496
        %v675 = vpop.f32.mrf.mxu0
        %v676 = vadd.f32 0.0, %v675
        %v677 = vpop.f32.mrf.mxu0
        %v678 = vpop.f32.mrf.mxu0
        %v679 = vadd.f32 0.0, %v678
        %v680 = vpop.f32.mrf.mxu0
        %681 = vmatprep.mubr.bf16.mxu0 0
        %682 = vmatmul.mubr.bf16.gmra.mxu0 %v497
        %v683 = vpop.f32.mrf.mxu0
        %v684 = vadd.f32 0.0, %v683
        %v685 = vpop.f32.mrf.mxu0
        %v686 = vpop.f32.mrf.mxu0
        %v687 = vadd.f32 0.0, %v686
        %v688 = vpop.f32.mrf.mxu0
        %689 = vmatprep.mubr.bf16.mxu0 0
        %690 = vmatmul.mubr.bf16.gmra.mxu0 %v498
        %v691 = vpop.f32.mrf.mxu0
        %v692 = vadd.f32 0.0, %v691
        %v693 = vpop.f32.mrf.mxu0
        %v694 = vpop.f32.mrf.mxu0
        %v695 = vadd.f32 0.0, %v694
        %v696 = vpop.f32.mrf.mxu0
        %697 = vmatprep.mubr.bf16.mxu0 0
        %698 = vmatmul.mubr.bf16.gmra.mxu0 %v499
        %v699 = vpop.f32.mrf.mxu0
        %v700 = vadd.f32 0.0, %v699
        %v701 = vpop.f32.mrf.mxu0
        %v702 = vpop.f32.mrf.mxu0
        %v703 = vadd.f32 0.0, %v702
        %v704 = vpop.f32.mrf.mxu0
        %705 = vmatprep.mubr.bf16.mxu0 0
        %706 = vmatmul.mubr.bf16.gmra.mxu0 %v500
        %v707 = vpop.f32.mrf.mxu0
        %v708 = vadd.f32 0.0, %v707
        %v709 = vpop.f32.mrf.mxu0
        %v710 = vpop.f32.mrf.mxu0
        %v711 = vadd.f32 0.0, %v710
        %v712 = vpop.f32.mrf.mxu0
        %713 = vmatprep.mubr.bf16.mxu0 0
        %714 = vmatmul.mubr.bf16.gmra.mxu0 %v501
        %v715 = vpop.f32.mrf.mxu0
        %v716 = vadd.f32 0.0, %v715
        %v717 = vpop.f32.mrf.mxu0
        %v718 = vpop.f32.mrf.mxu0
        %v719 = vadd.f32 0.0, %v718
        %v720 = vpop.f32.mrf.mxu0
        %721 = vmatprep.mubr.bf16.mxu0 0
        %722 = vmatmul.mubr.bf16.gmra.mxu0 %v502
        %v723 = vpop.f32.mrf.mxu0
        %v724 = vadd.f32 0.0, %v723
        %v725 = vpop.f32.mrf.mxu0
        %v726 = vpop.f32.mrf.mxu0
        %v727 = vadd.f32 0.0, %v726
        %v728 = vpop.f32.mrf.mxu0
        %729 = vmatprep.mubr.bf16.mxu0 0
        %730 = vmatmul.mubr.bf16.gmra.mxu0 %v503
        %v731 = vpop.f32.mrf.mxu0
        %v732 = vadd.f32 0.0, %v731
        %v733 = vpop.f32.mrf.mxu0
        %v734 = vpop.f32.mrf.mxu0
        %v735 = vadd.f32 0.0, %v734
        %v736 = vpop.f32.mrf.mxu0
        %737 = vmatprep.mubr.bf16.mxu0 0
        %738 = vmatmul.mubr.bf16.gmra.mxu0 %v504
        %v739 = vpop.f32.mrf.mxu0
        %v740 = vadd.f32 0.0, %v739
        %v741 = vpop.f32.mrf.mxu0
        %v742 = vpop.f32.mrf.mxu0
        %v743 = vadd.f32 0.0, %v742
        %v744 = vpop.f32.mrf.mxu0
        %745 = vmatprep.mubr.bf16.mxu0 0
        %746 = vmatmul.mubr.bf16.gmra.mxu0 %v505
        %v747 = vpop.f32.mrf.mxu0
        %v748 = vadd.f32 0.0, %v747
        %v749 = vpop.f32.mrf.mxu0
        %v750 = vpop.f32.mrf.mxu0
        %v751 = vadd.f32 0.0, %v750
        %v752 = vpop.f32.mrf.mxu0
        %753 = vmatprep.mubr.bf16.mxu0 0
        %754 = vmatmul.mubr.bf16.gmra.mxu0 %v506
        %v755 = vpop.f32.mrf.mxu0
        %v756 = vadd.f32 0.0, %v755
        %v757 = vpop.f32.mrf.mxu0
        %v758 = vpop.f32.mrf.mxu0
        %v759 = vadd.f32 0.0, %v758
        %v760 = vpop.f32.mrf.mxu0
        %761 = vmatprep.mubr.bf16.mxu0 0
        %762 = vmatmul.mubr.bf16.gmra.mxu0 %v507
        %v763 = vpop.f32.mrf.mxu0
        %v764 = vadd.f32 0.0, %v763
        %v765 = vpop.f32.mrf.mxu0
        %v766 = vpop.f32.mrf.mxu0
        %v767 = vadd.f32 0.0, %v766
        %v768 = vpop.f32.mrf.mxu0
        %769 = vmatprep.mubr.bf16.mxu0 0
        %770 = vmatmul.mubr.bf16.gmra.mxu0 %v508
        %v771 = vpop.f32.mrf.mxu0
        %v772 = vadd.f32 0.0, %v771
        %v773 = vpop.f32.mrf.mxu0
        %v774 = vpop.f32.mrf.mxu0
        %v775 = vadd.f32 0.0, %v774
        %v776 = vpop.f32.mrf.mxu0
        %777 = vmatprep.mubr.bf16.mxu0 0
        %778 = vmatmul.mubr.bf16.gmra.mxu0 %v509
        %v779 = vpop.f32.mrf.mxu0
        %v780 = vadd.f32 0.0, %v779
        %v781 = vpop.f32.mrf.mxu0
        %v782 = vpop.f32.mrf.mxu0
        %v783 = vadd.f32 0.0, %v782
        %v784 = vpop.f32.mrf.mxu0
        %785 = vmatprep.mubr.bf16.mxu0 0
        %786 = vmatmul.mubr.bf16.gmra.mxu0 %v510
        %v787 = vpop.f32.mrf.mxu0
        %v788 = vadd.f32 0.0, %v787
        %v789 = vpop.f32.mrf.mxu0
        %v790 = vpop.f32.mrf.mxu0
        %v791 = vadd.f32 0.0, %v790
        %v792 = vpop.f32.mrf.mxu0
        %793 = vmatprep.mubr.bf16.mxu0 0
        %794 = vmatmul.mubr.bf16.gmra.mxu0 %v511
        %v795 = vpop.f32.mrf.mxu0
        %v796 = vadd.f32 0.0, %v795
        %v797 = vpop.f32.mrf.mxu0
        %v798 = vpop.f32.mrf.mxu0
        %v799 = vadd.f32 0.0, %v798
        %v800 = vpop.f32.mrf.mxu0
        %801 = vmatprep.mubr.bf16.mxu0 0
        %802 = vmatmul.mubr.bf16.gmra.mxu0 %v512
        %v803 = vpop.f32.mrf.mxu0
        %v804 = vadd.f32 0.0, %v803
        %v805 = vpop.f32.mrf.mxu0
        %v806 = vpop.f32.mrf.mxu0
        %v807 = vadd.f32 0.0, %v806
        %v808 = vpop.f32.mrf.mxu0
        %809 = vdwg.mxu0
        %v810 = vpack.c.bf16 %v623, %v620
        %v811 = vpack.c.bf16 %v631, %v628
        %v812 = vpack.c.bf16 %v639, %v636
        %v813 = vpack.c.bf16 %v647, %v644
        %v814 = vpack.c.bf16 %v655, %v652
        %v815 = vpack.c.bf16 %v663, %v660
        %v816 = vpack.c.bf16 %v671, %v668
        %v817 = vpack.c.bf16 %v679, %v676
        %v818 = vpack.c.bf16 %v687, %v684
        %v819 = vpack.c.bf16 %v695, %v692
        %v820 = vpack.c.bf16 %v703, %v700
        %v821 = vpack.c.bf16 %v711, %v708
        %v822 = vpack.c.bf16 %v719, %v716
        %v823 = vpack.c.bf16 %v727, %v724
        %v824 = vpack.c.bf16 %v735, %v732
        %v825 = vpack.c.bf16 %v743, %v740
        %v826 = vpack.c.bf16 %v751, %v748
        %v827 = vpack.c.bf16 %v759, %v756
        %v828 = vpack.c.bf16 %v767, %v764
        %v829 = vpack.c.bf16 %v775, %v772
        %v830 = vpack.c.bf16 %v783, %v780
        %v831 = vpack.c.bf16 %v791, %v788
        %v832 = vpack.c.bf16 %v799, %v796
        %v833 = vpack.c.bf16 %v807, %v804
        %v858 = vunpack.c.l.b16 %v810
        %v859 = vunpack.c.h.b16 %v810
        %v860 = vunpack.c.l.b16 %v811
        %v861 = vunpack.c.h.b16 %v811
        %v862 = vunpack.c.l.b16 %v812
        %v863 = vunpack.c.h.b16 %v812
        %v864 = vunpack.c.l.b16 %v813
        %v865 = vunpack.c.h.b16 %v813
        %v866 = vunpack.c.l.b16 %v814
        %v867 = vunpack.c.h.b16 %v814
        %v868 = vunpack.c.l.b16 %v815
        %v869 = vunpack.c.h.b16 %v815
        %v870 = vunpack.c.l.b16 %v816
        %v871 = vunpack.c.h.b16 %v816
        %v872 = vunpack.c.l.b16 %v817
        %v873 = vunpack.c.h.b16 %v817
        %v874 = vunpack.c.l.b16 %v818
        %v875 = vunpack.c.h.b16 %v818
        %v876 = vunpack.c.l.b16 %v819
        %v877 = vunpack.c.h.b16 %v819
        %v878 = vunpack.c.l.b16 %v820
        %v879 = vunpack.c.h.b16 %v820
        %v880 = vunpack.c.l.b16 %v821
        %v881 = vunpack.c.h.b16 %v821
        %v882 = vunpack.c.l.b16 %v822
        %v883 = vunpack.c.h.b16 %v822
        %v884 = vunpack.c.l.b16 %v823
        %v885 = vunpack.c.h.b16 %v823
        %v886 = vunpack.c.l.b16 %v824
        %v887 = vunpack.c.h.b16 %v824
        %v888 = vunpack.c.l.b16 %v825
        %v889 = vunpack.c.h.b16 %v825
        %v890 = vunpack.c.l.b16 %v826
        %v891 = vunpack.c.h.b16 %v826
        %v892 = vunpack.c.l.b16 %v827
        %v893 = vunpack.c.h.b16 %v827
        %v894 = vunpack.c.l.b16 %v828
        %v895 = vunpack.c.h.b16 %v828
        %v896 = vunpack.c.l.b16 %v829
        %v897 = vunpack.c.h.b16 %v829
        %v898 = vunpack.c.l.b16 %v830
        %v899 = vunpack.c.h.b16 %v830
        %v900 = vunpack.c.l.b16 %v831
        %v901 = vunpack.c.h.b16 %v831
        %v902 = vunpack.c.l.b16 %v832
        %v903 = vunpack.c.h.b16 %v832
        %v904 = vunpack.c.l.b16 %v833
        %v905 = vunpack.c.h.b16 %v833
        %v906 = vpack.c.b16 %v858, %v858
        %v907 = vpack.c.b16 %v859, %v859
        %v908 = vpack.c.b16 %v860, %v860
        %v909 = vpack.c.b16 %v861, %v861
        %v910 = vpack.c.b16 %v862, %v862
        %v911 = vpack.c.b16 %v863, %v863
        %v912 = vpack.c.b16 %v864, %v864
        %v913 = vpack.c.b16 %v865, %v865
        %v914 = vpack.c.b16 %v866, %v866
        %v915 = vpack.c.b16 %v867, %v867
        %v916 = vpack.c.b16 %v868, %v868
        %v917 = vpack.c.b16 %v869, %v869
        %v918 = vpack.c.b16 %v870, %v870
        %v919 = vpack.c.b16 %v871, %v871
        %v920 = vpack.c.b16 %v872, %v872
        %v921 = vpack.c.b16 %v873, %v873
        %v922 = vpack.c.b16 %v874, %v874
        %v923 = vpack.c.b16 %v875, %v875
        %v924 = vpack.c.b16 %v876, %v876
        %v925 = vpack.c.b16 %v877, %v877
        %v926 = vpack.c.b16 %v878, %v878
        %v927 = vpack.c.b16 %v879, %v879
        %v928 = vpack.c.b16 %v880, %v880
        %v929 = vpack.c.b16 %v881, %v881
        %v930 = vpack.c.b16 %v882, %v882
        %v931 = vpack.c.b16 %v883, %v883
        %v932 = vpack.c.b16 %v884, %v884
        %v933 = vpack.c.b16 %v885, %v885
        %v934 = vpack.c.b16 %v886, %v886
        %v935 = vpack.c.b16 %v887, %v887
        %v936 = vpack.c.b16 %v888, %v888
        %v937 = vpack.c.b16 %v889, %v889
        %v938 = vpack.c.b16 %v890, %v890
        %v939 = vpack.c.b16 %v891, %v891
        %v940 = vpack.c.b16 %v892, %v892
        %v941 = vpack.c.b16 %v893, %v893
        %v942 = vpack.c.b16 %v894, %v894
        %v943 = vpack.c.b16 %v895, %v895
        %v944 = vpack.c.b16 %v896, %v896
        %v945 = vpack.c.b16 %v897, %v897
        %v946 = vpack.c.b16 %v898, %v898
        %v947 = vpack.c.b16 %v899, %v899
        %v948 = vpack.c.b16 %v900, %v900
        %v949 = vpack.c.b16 %v901, %v901
        %v950 = vpack.c.b16 %v902, %v902
        %v951 = vpack.c.b16 %v903, %v903
        %v952 = vpack.c.b16 %v904, %v904
        %v953 = vpack.c.b16 %v905, %v905
        %1002 = vst [vmem:[#allocation2] sm:$0xf] %v906
        %1003 = vst [vmem:[#allocation2 + $0x4] sm:$0xf] %v907
        %1004 = vst [vmem:[#allocation2 + $0x8] sm:$0xf] %v908
        %1005 = vst [vmem:[#allocation2 + $0xc] sm:$0xf] %v909
        %1006 = vst [vmem:[#allocation2 + $0x10] sm:$0xf] %v910
        %1007 = vst [vmem:[#allocation2 + $0x14] sm:$0xf] %v911
        %1008 = vst [vmem:[#allocation2 + $0x18] sm:$0xf] %v912
        %1009 = vst [vmem:[#allocation2 + $0x1c] sm:$0xf] %v913
        %1010 = vst [vmem:[#allocation2 + $0x20] sm:$0xf] %v914
        %1011 = vst [vmem:[#allocation2 + $0x24] sm:$0xf] %v915
        %1012 = vst [vmem:[#allocation2 + $0x28] sm:$0xf] %v916
        %1013 = vst [vmem:[#allocation2 + $0x2c] sm:$0xf] %v917
        %1014 = vst [vmem:[#allocation2 + $0x30] sm:$0xf] %v918
        %1015 = vst [vmem:[#allocation2 + $0x34] sm:$0xf] %v919
        %1016 = vst [vmem:[#allocation2 + $0x38] sm:$0xf] %v920
        %1017 = vst [vmem:[#allocation2 + $0x3c] sm:$0xf] %v921
        %1018 = vst [vmem:[#allocation2 + $0x40] sm:$0xf] %v922
        %1019 = vst [vmem:[#allocation2 + $0x44] sm:$0xf] %v923
        %1020 = vst [vmem:[#allocation2 + $0x48] sm:$0xf] %v924
        %1021 = vst [vmem:[#allocation2 + $0x4c] sm:$0xf] %v925
        %1022 = vst [vmem:[#allocation2 + $0x50] sm:$0xf] %v926
        %1023 = vst [vmem:[#allocation2 + $0x54] sm:$0xf] %v927
        %1024 = vst [vmem:[#allocation2 + $0x58] sm:$0xf] %v928
        %1025 = vst [vmem:[#allocation2 + $0x5c] sm:$0xf] %v929
        %1026 = vst [vmem:[#allocation2 + $0x60] sm:$0xf] %v930
        %1027 = vst [vmem:[#allocation2 + $0x64] sm:$0xf] %v931
        %1028 = vst [vmem:[#allocation2 + $0x68] sm:$0xf] %v932
        %1029 = vst [vmem:[#allocation2 + $0x6c] sm:$0xf] %v933
        %1030 = vst [vmem:[#allocation2 + $0x70] sm:$0xf] %v934
        %1031 = vst [vmem:[#allocation2 + $0x74] sm:$0xf] %v935
        %1032 = vst [vmem:[#allocation2 + $0x78] sm:$0xf] %v936
        %1033 = vst [vmem:[#allocation2 + $0x7c] sm:$0xf] %v937
        %1034 = vst [vmem:[#allocation2 + $0x80] sm:$0xf] %v938
        %1035 = vst [vmem:[#allocation2 + $0x84] sm:$0xf] %v939
        %1036 = vst [vmem:[#allocation2 + $0x88] sm:$0xf] %v940
        %1037 = vst [vmem:[#allocation2 + $0x8c] sm:$0xf] %v941
        %1038 = vst [vmem:[#allocation2 + $0x90] sm:$0xf] %v942
        %1039 = vst [vmem:[#allocation2 + $0x94] sm:$0xf] %v943
        %1040 = vst [vmem:[#allocation2 + $0x98] sm:$0xf] %v944
        %1041 = vst [vmem:[#allocation2 + $0x9c] sm:$0xf] %v945
        %1042 = vst [vmem:[#allocation2 + $0xa0] sm:$0xf] %v946
        %1043 = vst [vmem:[#allocation2 + $0xa4] sm:$0xf] %v947
        %1044 = vst [vmem:[#allocation2 + $0xa8] sm:$0xf] %v948
        %1045 = vst [vmem:[#allocation2 + $0xac] sm:$0xf] %v949
        %1046 = vst [vmem:[#allocation2 + $0xb0] sm:$0xf] %v950
        %1047 = vst [vmem:[#allocation2 + $0xb4] sm:$0xf] %v951
        %1048 = vst [vmem:[#allocation2 + $0xb8] sm:$0xf] %v952
        %1049 = vst [vmem:[#allocation2 + $0xbc] sm:$0xf] %v953
        %v1050 = vld [vmem:[%s272] sm:$0xf]
        %v1051 = vld [vmem:[%s272 + $0x4] sm:$0xf]
        %v1052 = vld [vmem:[%s272 + $0x8] sm:$0xf]
        %v1053 = vld [vmem:[%s272 + $0xc] sm:$0xf]
        %v1054 = vld [vmem:[%s272 + $0x10] sm:$0xf]
        %v1055 = vld [vmem:[%s272 + $0x14] sm:$0xf]
        %v1056 = vld [vmem:[%s272 + $0x18] sm:$0xf]
        %v1057 = vld [vmem:[%s272 + $0x1c] sm:$0xf]
        %v1058 = vld [vmem:[%s272 + $0x20] sm:$0xf]
        %v1059 = vld [vmem:[%s272 + $0x24] sm:$0xf]
        %v1060 = vld [vmem:[%s272 + $0x28] sm:$0xf]
        %v1061 = vld [vmem:[%s272 + $0x2c] sm:$0xf]
        %v1062 = vld [vmem:[%s272 + $0x30] sm:$0xf]
        %v1063 = vld [vmem:[%s272 + $0x34] sm:$0xf]
        %v1064 = vld [vmem:[%s272 + $0x38] sm:$0xf]
        %v1065 = vld [vmem:[%s272 + $0x3c] sm:$0xf]
        %v1066 = vld [vmem:[#allocation8] sm:$0xf]
        %v1067 = vld [vmem:[#allocation8 + $0x4] sm:$0xf]
        %v1068 = vld [vmem:[#allocation8 + $0x8] sm:$0xf]
        %v1069 = vld [vmem:[#allocation8 + $0xc] sm:$0xf]
        %v1070 = vld [vmem:[#allocation8 + $0x10] sm:$0xf]
        %v1071 = vld [vmem:[#allocation8 + $0x14] sm:$0xf]
        %v1072 = vld [vmem:[#allocation8 + $0x18] sm:$0xf]
        %v1073 = vld [vmem:[#allocation8 + $0x1c] sm:$0xf]
        %v1074 = vld [vmem:[#allocation8 + $0x20] sm:$0xf]
        %v1075 = vld [vmem:[#allocation8 + $0x24] sm:$0xf]
        %v1076 = vld [vmem:[#allocation8 + $0x28] sm:$0xf]
        %v1077 = vld [vmem:[#allocation8 + $0x2c] sm:$0xf]
        %v1078 = vld [vmem:[#allocation8 + $0x30] sm:$0xf]
        %v1079 = vld [vmem:[#allocation8 + $0x34] sm:$0xf]
        %v1080 = vld [vmem:[#allocation8 + $0x38] sm:$0xf]
        %v1081 = vld [vmem:[#allocation8 + $0x3c] sm:$0xf]
        %v1082 = vld [vmem:[%s293] sm:$0xff]
        %v1083 = vld [vmem:[%s293 + $0x8] sm:$0xf]
        %v1084 = vld [vmem:[%s293 + $0xc] sm:$0xff]
        %v1085 = vld [vmem:[%s293 + $0x14] sm:$0xf]
        %v1086 = vld [vmem:[%s293 + $0x18] sm:$0xff]
        %v1087 = vld [vmem:[%s293 + $0x20] sm:$0xf]
        %v1088 = vld [vmem:[%s293 + $0x24] sm:$0xff]
        %v1089 = vld [vmem:[%s293 + $0x2c] sm:$0xf]
        %v1090 = vld [vmem:[%s293 + $0x30] sm:$0xff]
        %v1091 = vld [vmem:[%s293 + $0x38] sm:$0xf]
        %v1092 = vld [vmem:[%s293 + $0x3c] sm:$0xff]
        %v1093 = vld [vmem:[%s293 + $0x44] sm:$0xf]
        %v1094 = vld [vmem:[%s293 + $0x48] sm:$0xff]
        %v1095 = vld [vmem:[%s293 + $0x50] sm:$0xf]
        %v1096 = vld [vmem:[%s293 + $0x54] sm:$0xff]
        %v1097 = vld [vmem:[%s293 + $0x5c] sm:$0xf]
        %v1098 = vld [vmem:[%s293 + $0x60] sm:$0xff]
        %v1099 = vld [vmem:[%s293 + $0x68] sm:$0xf]
        %v1100 = vld [vmem:[%s293 + $0x6c] sm:$0xff]
        %v1101 = vld [vmem:[%s293 + $0x74] sm:$0xf]
        %v1102 = vld [vmem:[%s293 + $0x78] sm:$0xff]
        %v1103 = vld [vmem:[%s293 + $0x80] sm:$0xf]
        %v1104 = vld [vmem:[%s293 + $0x84] sm:$0xff]
        %v1105 = vld [vmem:[%s293 + $0x8c] sm:$0xf]
        %v1106 = vld [vmem:[%s293 + $0x90] sm:$0xff]
        %v1107 = vld [vmem:[%s293 + $0x98] sm:$0xf]
        %v1108 = vld [vmem:[%s293 + $0x9c] sm:$0xff]
        %v1109 = vld [vmem:[%s293 + $0xa4] sm:$0xf]
        %v1110 = vld [vmem:[%s293 + $0xa8] sm:$0xff]
        %v1111 = vld [vmem:[%s293 + $0xb0] sm:$0xf]
        %v1112 = vld [vmem:[%s293 + $0xb4] sm:$0xff]
        %v1113 = vld [vmem:[%s293 + $0xbc] sm:$0xf]
        %v1114 = vld [vmem:[#allocation2] sm:$0xf]
        %v1115 = vld [vmem:[#allocation2 + $0x4] sm:$0xf]
        %v1116 = vld [vmem:[#allocation2 + $0x8] sm:$0xf]
        %v1117 = vld [vmem:[#allocation2 + $0xc] sm:$0xf]
        %v1118 = vld [vmem:[#allocation2 + $0x10] sm:$0xf]
        %v1119 = vld [vmem:[#allocation2 + $0x14] sm:$0xf]
        %v1120 = vld [vmem:[#allocation2 + $0x18] sm:$0xf]
        %v1121 = vld [vmem:[#allocation2 + $0x1c] sm:$0xf]
        %v1122 = vld [vmem:[#allocation2 + $0x20] sm:$0xf]
        %v1123 = vld [vmem:[#allocation2 + $0x24] sm:$0xf]
        %v1124 = vld [vmem:[#allocation2 + $0x28] sm:$0xf]
        %v1125 = vld [vmem:[#allocation2 + $0x2c] sm:$0xf]
        %v1126 = vld [vmem:[#allocation2 + $0x30] sm:$0xf]
        %v1127 = vld [vmem:[#allocation2 + $0x34] sm:$0xf]
        %v1128 = vld [vmem:[#allocation2 + $0x38] sm:$0xf]
        %v1129 = vld [vmem:[#allocation2 + $0x3c] sm:$0xf]
        %v1130 = vld [vmem:[#allocation2 + $0x40] sm:$0xf]
        %v1131 = vld [vmem:[#allocation2 + $0x44] sm:$0xf]
        %v1132 = vld [vmem:[#allocation2 + $0x48] sm:$0xf]
        %v1133 = vld [vmem:[#allocation2 + $0x4c] sm:$0xf]
        %v1134 = vld [vmem:[#allocation2 + $0x50] sm:$0xf]
        %v1135 = vld [vmem:[#allocation2 + $0x54] sm:$0xf]
        %v1136 = vld [vmem:[#allocation2 + $0x58] sm:$0xf]
        %v1137 = vld [vmem:[#allocation2 + $0x5c] sm:$0xf]
        %v1138 = vld [vmem:[#allocation2 + $0x60] sm:$0xf]
        %v1139 = vld [vmem:[#allocation2 + $0x64] sm:$0xf]
        %v1140 = vld [vmem:[#allocation2 + $0x68] sm:$0xf]
        %v1141 = vld [vmem:[#allocation2 + $0x6c] sm:$0xf]
        %v1142 = vld [vmem:[#allocation2 + $0x70] sm:$0xf]
        %v1143 = vld [vmem:[#allocation2 + $0x74] sm:$0xf]
        %v1144 = vld [vmem:[#allocation2 + $0x78] sm:$0xf]
        %v1145 = vld [vmem:[#allocation2 + $0x7c] sm:$0xf]
        %v1146 = vld [vmem:[#allocation2 + $0x80] sm:$0xf]
        %v1147 = vld [vmem:[#allocation2 + $0x84] sm:$0xf]
        %v1148 = vld [vmem:[#allocation2 + $0x88] sm:$0xf]
        %v1149 = vld [vmem:[#allocation2 + $0x8c] sm:$0xf]
        %v1150 = vld [vmem:[#allocation2 + $0x90] sm:$0xf]
        %v1151 = vld [vmem:[#allocation2 + $0x94] sm:$0xf]
        %v1152 = vld [vmem:[#allocation2 + $0x98] sm:$0xf]
        %v1153 = vld [vmem:[#allocation2 + $0x9c] sm:$0xf]
        %v1154 = vld [vmem:[#allocation2 + $0xa0] sm:$0xf]
        %v1155 = vld [vmem:[#allocation2 + $0xa4] sm:$0xf]
        %v1156 = vld [vmem:[#allocation2 + $0xa8] sm:$0xf]
        %v1157 = vld [vmem:[#allocation2 + $0xac] sm:$0xf]
        %v1158 = vld [vmem:[#allocation2 + $0xb0] sm:$0xf]
        %v1159 = vld [vmem:[#allocation2 + $0xb4] sm:$0xf]
        %v1160 = vld [vmem:[#allocation2 + $0xb8] sm:$0xf]
        %v1161 = vld [vmem:[#allocation2 + $0xbc] sm:$0xf]
        %v1194 = vunpack.c.l.b16 %v1082
        %v1195 = vunpack.c.h.b16 %v1082
        %v1196 = vunpack.c.l.b16 %v1083
        %v1197 = vunpack.c.l.b16 %v1084
        %v1198 = vunpack.c.h.b16 %v1084
        %v1199 = vunpack.c.l.b16 %v1085
        %v1200 = vunpack.c.l.b16 %v1086
        %v1201 = vunpack.c.h.b16 %v1086
        %v1202 = vunpack.c.l.b16 %v1087
        %v1203 = vunpack.c.l.b16 %v1088
        %v1204 = vunpack.c.h.b16 %v1088
        %v1205 = vunpack.c.l.b16 %v1089
        %v1206 = vunpack.c.l.b16 %v1090
        %v1207 = vunpack.c.h.b16 %v1090
        %v1208 = vunpack.c.l.b16 %v1091
        %v1209 = vunpack.c.l.b16 %v1092
        %v1210 = vunpack.c.h.b16 %v1092
        %v1211 = vunpack.c.l.b16 %v1093
        %v1212 = vunpack.c.l.b16 %v1094
        %v1213 = vunpack.c.h.b16 %v1094
        %v1214 = vunpack.c.l.b16 %v1095
        %v1215 = vunpack.c.l.b16 %v1096
        %v1216 = vunpack.c.h.b16 %v1096
        %v1217 = vunpack.c.l.b16 %v1097
        %v1218 = vunpack.c.l.b16 %v1098
        %v1219 = vunpack.c.h.b16 %v1098
        %v1220 = vunpack.c.l.b16 %v1099
        %v1221 = vunpack.c.l.b16 %v1100
        %v1222 = vunpack.c.h.b16 %v1100
        %v1223 = vunpack.c.l.b16 %v1101
        %v1224 = vunpack.c.l.b16 %v1102
        %v1225 = vunpack.c.h.b16 %v1102
        %v1226 = vunpack.c.l.b16 %v1103
        %v1227 = vunpack.c.l.b16 %v1104
        %v1228 = vunpack.c.h.b16 %v1104
        %v1229 = vunpack.c.l.b16 %v1105
        %v1230 = vunpack.c.l.b16 %v1106
        %v1231 = vunpack.c.h.b16 %v1106
        %v1232 = vunpack.c.l.b16 %v1107
        %v1233 = vunpack.c.l.b16 %v1108
        %v1234 = vunpack.c.h.b16 %v1108
        %v1235 = vunpack.c.l.b16 %v1109
        %v1236 = vunpack.c.l.b16 %v1110
        %v1237 = vunpack.c.h.b16 %v1110
        %v1238 = vunpack.c.l.b16 %v1111
        %v1239 = vunpack.c.l.b16 %v1112
        %v1240 = vunpack.c.h.b16 %v1112
        %v1241 = vunpack.c.l.b16 %v1113
        %v1242 = vpack.c.b16 %v1197, %v1194
        %v1243 = vpack.c.b16 %v1198, %v1195
        %v1244 = vpack.c.b16 %v1199, %v1196
        %v1245 = vpack.c.b16 %v1203, %v1200
        %v1246 = vpack.c.b16 %v1204, %v1201
        %v1247 = vpack.c.b16 %v1205, %v1202
        %v1248 = vpack.c.b16 %v1209, %v1206
        %v1249 = vpack.c.b16 %v1210, %v1207
        %v1250 = vpack.c.b16 %v1211, %v1208
        %v1251 = vpack.c.b16 %v1215, %v1212
        %v1252 = vpack.c.b16 %v1216, %v1213
        %v1253 = vpack.c.b16 %v1217, %v1214
        %v1254 = vpack.c.b16 %v1221, %v1218
        %v1255 = vpack.c.b16 %v1222, %v1219
        %v1256 = vpack.c.b16 %v1223, %v1220
        %v1257 = vpack.c.b16 %v1227, %v1224
        %v1258 = vpack.c.b16 %v1228, %v1225
        %v1259 = vpack.c.b16 %v1229, %v1226
        %v1260 = vpack.c.b16 %v1233, %v1230
        %v1261 = vpack.c.b16 %v1234, %v1231
        %v1262 = vpack.c.b16 %v1235, %v1232
        %v1263 = vpack.c.b16 %v1239, %v1236
        %v1264 = vpack.c.b16 %v1240, %v1237
        %v1265 = vpack.c.b16 %v1241, %v1238
        %v1338 = vunpack.c.l.b16 %v1114
        %v1339 = vunpack.c.l.b16 %v1115
        %v1340 = vunpack.c.l.b16 %v1116
        %v1341 = vunpack.c.l.b16 %v1117
        %v1342 = vunpack.c.l.b16 %v1118
        %v1343 = vunpack.c.l.b16 %v1119
        %v1344 = vunpack.c.l.b16 %v1120
        %v1345 = vunpack.c.l.b16 %v1121
        %v1346 = vunpack.c.l.b16 %v1122
        %v1347 = vunpack.c.l.b16 %v1123
        %v1348 = vunpack.c.l.b16 %v1124
        %v1349 = vunpack.c.l.b16 %v1125
        %v1350 = vunpack.c.l.b16 %v1126
        %v1351 = vunpack.c.l.b16 %v1127
        %v1352 = vunpack.c.l.b16 %v1128
        %v1353 = vunpack.c.l.b16 %v1129
        %v1354 = vunpack.c.l.b16 %v1130
        %v1355 = vunpack.c.l.b16 %v1131
        %v1356 = vunpack.c.l.b16 %v1132
        %v1357 = vunpack.c.l.b16 %v1133
        %v1358 = vunpack.c.l.b16 %v1134
        %v1359 = vunpack.c.l.b16 %v1135
        %v1360 = vunpack.c.l.b16 %v1136
        %v1361 = vunpack.c.l.b16 %v1137
        %v1362 = vunpack.c.l.b16 %v1138
        %v1363 = vunpack.c.l.b16 %v1139
        %v1364 = vunpack.c.l.b16 %v1140
        %v1365 = vunpack.c.l.b16 %v1141
        %v1366 = vunpack.c.l.b16 %v1142
        %v1367 = vunpack.c.l.b16 %v1143
        %v1368 = vunpack.c.l.b16 %v1144
        %v1369 = vunpack.c.l.b16 %v1145
        %v1370 = vunpack.c.l.b16 %v1146
        %v1371 = vunpack.c.l.b16 %v1147
        %v1372 = vunpack.c.l.b16 %v1148
        %v1373 = vunpack.c.l.b16 %v1149
        %v1374 = vunpack.c.l.b16 %v1150
        %v1375 = vunpack.c.l.b16 %v1151
        %v1376 = vunpack.c.l.b16 %v1152
        %v1377 = vunpack.c.l.b16 %v1153
        %v1378 = vunpack.c.l.b16 %v1154
        %v1379 = vunpack.c.l.b16 %v1155
        %v1380 = vunpack.c.l.b16 %v1156
        %v1381 = vunpack.c.l.b16 %v1157
        %v1382 = vunpack.c.l.b16 %v1158
        %v1383 = vunpack.c.l.b16 %v1159
        %v1384 = vunpack.c.l.b16 %v1160
        %v1385 = vunpack.c.l.b16 %v1161
        %v1386 = vpack.c.b16 %v1339, %v1338
        %v1387 = vpack.c.b16 %v1341, %v1340
        %v1388 = vpack.c.b16 %v1343, %v1342
        %v1389 = vpack.c.b16 %v1345, %v1344
        %v1390 = vpack.c.b16 %v1347, %v1346
        %v1391 = vpack.c.b16 %v1349, %v1348
        %v1392 = vpack.c.b16 %v1351, %v1350
        %v1393 = vpack.c.b16 %v1353, %v1352
        %v1394 = vpack.c.b16 %v1355, %v1354
        %v1395 = vpack.c.b16 %v1357, %v1356
        %v1396 = vpack.c.b16 %v1359, %v1358
        %v1397 = vpack.c.b16 %v1361, %v1360
        %v1398 = vpack.c.b16 %v1363, %v1362
        %v1399 = vpack.c.b16 %v1365, %v1364
        %v1400 = vpack.c.b16 %v1367, %v1366
        %v1401 = vpack.c.b16 %v1369, %v1368
        %v1402 = vpack.c.b16 %v1371, %v1370
        %v1403 = vpack.c.b16 %v1373, %v1372
        %v1404 = vpack.c.b16 %v1375, %v1374
        %v1405 = vpack.c.b16 %v1377, %v1376
        %v1406 = vpack.c.b16 %v1379, %v1378
        %v1407 = vpack.c.b16 %v1381, %v1380
        %v1408 = vpack.c.b16 %v1383, %v1382
        %v1409 = vpack.c.b16 %v1385, %v1384
        %1434 = vmatprep.subr.bf16.mxu0 0
        %1435 = vmatpush1.bf16.msra.mxu0 %v1393
        %1436 = vmatprep.subr.bf16.mxu0 0
        %1437 = vmatpush1.bf16.msra.mxu0 %v1392
        %1438 = vmatprep.subr.bf16.mxu0 0
        %1439 = vmatpush1.bf16.msra.mxu0 %v1391
        %1440 = vmatprep.subr.bf16.mxu0 0
        %1441 = vmatpush1.bf16.msra.mxu0 %v1390
        %1442 = vmatprep.subr.bf16.mxu0 0
        %1443 = vmatpush1.bf16.msra.mxu0 %v1389
        %1444 = vmatprep.subr.bf16.mxu0 0
        %1445 = vmatpush1.bf16.msra.mxu0 %v1388
        %1446 = vmatprep.subr.bf16.mxu0 0
        %1447 = vmatpush1.bf16.msra.mxu0 %v1387
        %1448 = vmatprep.subr.bf16.mxu0 0
        %1449 = vmatpush1.bf16.msra.mxu0 %v1386
        %1450 = vmatprep.subr.bf16.mxu0 0
        %1451 = vmatpush2.bf16.msra.mxu0 %v1401
        %1452 = vmatprep.subr.bf16.mxu0 0
        %1453 = vmatpush2.bf16.msra.mxu0 %v1400
        %1454 = vmatprep.subr.bf16.mxu0 0
        %1455 = vmatpush2.bf16.msra.mxu0 %v1399
        %1456 = vmatprep.subr.bf16.mxu0 0
        %1457 = vmatpush2.bf16.msra.mxu0 %v1398
        %1458 = vmatprep.subr.bf16.mxu0 0
        %1459 = vmatpush2.bf16.msra.mxu0 %v1397
        %1460 = vmatprep.subr.bf16.mxu0 0
        %1461 = vmatpush2.bf16.msra.mxu0 %v1396
        %1462 = vmatprep.subr.bf16.mxu0 0
        %1463 = vmatpush2.bf16.msra.mxu0 %v1395
        %1464 = vmatprep.subr.bf16.mxu0 0
        %1465 = vmatpush2.bf16.msra.mxu0 %v1394
        %1466 = vmatprep.mubr.bf16.mxu0 %v1243
        %1467 = vmatmul.mubr.bf16.gmra.mxu0 %v1242
        %v1468 = vpop.f32.mrf.mxu0
        %v1469 = vadd.f32 0.0, %v1468
        %v1470 = vpop.f32.mrf.mxu0
        %v1471 = vpop.f32.mrf.mxu0
        %v1472 = vadd.f32 0.0, %v1471
        %v1473 = vpop.f32.mrf.mxu0
        %1474 = vmatprep.mubr.bf16.mxu0 %v1246
        %1475 = vmatmul.mubr.bf16.gmra.mxu0 %v1245
        %v1476 = vpop.f32.mrf.mxu0
        %v1477 = vadd.f32 0.0, %v1476
        %v1478 = vpop.f32.mrf.mxu0
        %v1479 = vpop.f32.mrf.mxu0
        %v1480 = vadd.f32 0.0, %v1479
        %v1481 = vpop.f32.mrf.mxu0
        %1482 = vmatprep.mubr.bf16.mxu0 %v1249
        %1483 = vmatmul.mubr.bf16.gmra.mxu0 %v1248
        %v1484 = vpop.f32.mrf.mxu0
        %v1485 = vadd.f32 0.0, %v1484
        %v1486 = vpop.f32.mrf.mxu0
        %v1487 = vpop.f32.mrf.mxu0
        %v1488 = vadd.f32 0.0, %v1487
        %v1489 = vpop.f32.mrf.mxu0
        %1490 = vmatprep.mubr.bf16.mxu0 %v1252
        %1491 = vmatmul.mubr.bf16.gmra.mxu0 %v1251
        %v1492 = vpop.f32.mrf.mxu0
        %v1493 = vadd.f32 0.0, %v1492
        %v1494 = vpop.f32.mrf.mxu0
        %v1495 = vpop.f32.mrf.mxu0
        %v1496 = vadd.f32 0.0, %v1495
        %v1497 = vpop.f32.mrf.mxu0
        %1498 = vmatprep.mubr.bf16.mxu0 %v1255
        %1499 = vmatmul.mubr.bf16.gmra.mxu0 %v1254
        %v1500 = vpop.f32.mrf.mxu0
        %v1501 = vadd.f32 0.0, %v1500
        %v1502 = vpop.f32.mrf.mxu0
        %v1503 = vpop.f32.mrf.mxu0
        %v1504 = vadd.f32 0.0, %v1503
        %v1505 = vpop.f32.mrf.mxu0
        %1506 = vmatprep.mubr.bf16.mxu0 %v1258
        %1507 = vmatmul.mubr.bf16.gmra.mxu0 %v1257
        %v1508 = vpop.f32.mrf.mxu0
        %v1509 = vadd.f32 0.0, %v1508
        %v1510 = vpop.f32.mrf.mxu0
        %v1511 = vpop.f32.mrf.mxu0
        %v1512 = vadd.f32 0.0, %v1511
        %v1513 = vpop.f32.mrf.mxu0
        %1514 = vmatprep.mubr.bf16.mxu0 %v1261
        %1515 = vmatmul.mubr.bf16.gmra.mxu0 %v1260
        %v1516 = vpop.f32.mrf.mxu0
        %v1517 = vadd.f32 0.0, %v1516
        %v1518 = vpop.f32.mrf.mxu0
        %v1519 = vpop.f32.mrf.mxu0
        %v1520 = vadd.f32 0.0, %v1519
        %v1521 = vpop.f32.mrf.mxu0
        %1522 = vmatprep.mubr.bf16.mxu0 %v1264
        %1523 = vmatmul.mubr.bf16.gmra.mxu0 %v1263
        %v1524 = vpop.f32.mrf.mxu0
        %v1525 = vadd.f32 0.0, %v1524
        %v1526 = vpop.f32.mrf.mxu0
        %v1527 = vpop.f32.mrf.mxu0
        %v1528 = vadd.f32 0.0, %v1527
        %v1529 = vpop.f32.mrf.mxu0
        %1530 = vdwg.mxu0
        %1531 = vmatprep.subr.bf16.mxu0 0
        %1532 = vmatpush1.bf16.msra.mxu0 %v1409
        %1533 = vmatprep.subr.bf16.mxu0 0
        %1534 = vmatpush1.bf16.msra.mxu0 %v1408
        %1535 = vmatprep.subr.bf16.mxu0 0
        %1536 = vmatpush1.bf16.msra.mxu0 %v1407
        %1537 = vmatprep.subr.bf16.mxu0 0
        %1538 = vmatpush1.bf16.msra.mxu0 %v1406
        %1539 = vmatprep.subr.bf16.mxu0 0
        %1540 = vmatpush1.bf16.msra.mxu0 %v1405
        %1541 = vmatprep.subr.bf16.mxu0 0
        %1542 = vmatpush1.bf16.msra.mxu0 %v1404
        %1543 = vmatprep.subr.bf16.mxu0 0
        %1544 = vmatpush1.bf16.msra.mxu0 %v1403
        %1545 = vmatprep.subr.bf16.mxu0 0
        %1546 = vmatpush1.bf16.msra.mxu0 %v1402
        %1547 = vmatprep.subr.bf16.mxu0 0
        %1548 = vmatpush2.bf16.msra.mxu0 0
        %1549 = vmatprep.subr.bf16.mxu0 0
        %1550 = vmatpush2.bf16.msra.mxu0 0
        %1551 = vmatprep.subr.bf16.mxu0 0
        %1552 = vmatpush2.bf16.msra.mxu0 0
        %1553 = vmatprep.subr.bf16.mxu0 0
        %1554 = vmatpush2.bf16.msra.mxu0 0
        %1555 = vmatprep.subr.bf16.mxu0 0
        %1556 = vmatpush2.bf16.msra.mxu0 0
        %1557 = vmatprep.subr.bf16.mxu0 0
        %1558 = vmatpush2.bf16.msra.mxu0 0
        %1559 = vmatprep.subr.bf16.mxu0 0
        %1560 = vmatpush2.bf16.msra.mxu0 0
        %1561 = vmatprep.subr.bf16.mxu0 0
        %1562 = vmatpush2.bf16.msra.mxu0 0
        %1563 = vmatprep.mubr.bf16.mxu0 0
        %1564 = vmatmul.mubr.bf16.gmra.mxu0 %v1244
        %v1565 = vpop.f32.mrf.mxu0
        %v1566 = vadd.f32 %v1469, %v1565
        %v1567 = vpop.f32.mrf.mxu0
        %v1568 = vpop.f32.mrf.mxu0
        %v1569 = vadd.f32 %v1472, %v1568
        %v1570 = vpop.f32.mrf.mxu0
        %1571 = vmatprep.mubr.bf16.mxu0 0
        %1572 = vmatmul.mubr.bf16.gmra.mxu0 %v1247
        %v1573 = vpop.f32.mrf.mxu0
        %v1574 = vadd.f32 %v1477, %v1573
        %v1575 = vpop.f32.mrf.mxu0
        %v1576 = vpop.f32.mrf.mxu0
        %v1577 = vadd.f32 %v1480, %v1576
        %v1578 = vpop.f32.mrf.mxu0
        %1579 = vmatprep.mubr.bf16.mxu0 0
        %1580 = vmatmul.mubr.bf16.gmra.mxu0 %v1250
        %v1581 = vpop.f32.mrf.mxu0
        %v1582 = vadd.f32 %v1485, %v1581
        %v1583 = vpop.f32.mrf.mxu0
        %v1584 = vpop.f32.mrf.mxu0
        %v1585 = vadd.f32 %v1488, %v1584
        %v1586 = vpop.f32.mrf.mxu0
        %1587 = vmatprep.mubr.bf16.mxu0 0
        %1588 = vmatmul.mubr.bf16.gmra.mxu0 %v1253
        %v1589 = vpop.f32.mrf.mxu0
        %v1590 = vadd.f32 %v1493, %v1589
        %v1591 = vpop.f32.mrf.mxu0
        %v1592 = vpop.f32.mrf.mxu0
        %v1593 = vadd.f32 %v1496, %v1592
        %v1594 = vpop.f32.mrf.mxu0
        %1595 = vmatprep.mubr.bf16.mxu0 0
        %1596 = vmatmul.mubr.bf16.gmra.mxu0 %v1256
        %v1597 = vpop.f32.mrf.mxu0
        %v1598 = vadd.f32 %v1501, %v1597
        %v1599 = vpop.f32.mrf.mxu0
        %v1600 = vpop.f32.mrf.mxu0
        %v1601 = vadd.f32 %v1504, %v1600
        %v1602 = vpop.f32.mrf.mxu0
        %1603 = vmatprep.mubr.bf16.mxu0 0
        %1604 = vmatmul.mubr.bf16.gmra.mxu0 %v1259
        %v1605 = vpop.f32.mrf.mxu0
        %v1606 = vadd.f32 %v1509, %v1605
        %v1607 = vpop.f32.mrf.mxu0
        %v1608 = vpop.f32.mrf.mxu0
        %v1609 = vadd.f32 %v1512, %v1608
        %v1610 = vpop.f32.mrf.mxu0
        %1611 = vmatprep.mubr.bf16.mxu0 0
        %1612 = vmatmul.mubr.bf16.gmra.mxu0 %v1262
        %v1613 = vpop.f32.mrf.mxu0
        %v1614 = vadd.f32 %v1517, %v1613
        %v1615 = vpop.f32.mrf.mxu0
        %v1616 = vpop.f32.mrf.mxu0
        %v1617 = vadd.f32 %v1520, %v1616
        %v1618 = vpop.f32.mrf.mxu0
        %1619 = vmatprep.mubr.bf16.mxu0 0
        %1620 = vmatmul.mubr.bf16.gmra.mxu0 %v1265
        %v1621 = vpop.f32.mrf.mxu0
        %v1622 = vadd.f32 %v1525, %v1621
        %v1623 = vpop.f32.mrf.mxu0
        %v1624 = vpop.f32.mrf.mxu0
        %v1625 = vadd.f32 %v1528, %v1624
        %v1626 = vpop.f32.mrf.mxu0
        %1627 = vdwg.mxu0
        %vm1628 = vcmp.ge.f32.partialorder %v1566, 0.0
        %vm1629 = vcmp.ge.f32.partialorder %v1569, 0.0
        %vm1630 = vcmp.ge.f32.partialorder %v1574, 0.0
        %vm1631 = vcmp.ge.f32.partialorder %v1577, 0.0
        %vm1632 = vcmp.ge.f32.partialorder %v1582, 0.0
        %vm1633 = vcmp.ge.f32.partialorder %v1585, 0.0
        %vm1634 = vcmp.ge.f32.partialorder %v1590, 0.0
        %vm1635 = vcmp.ge.f32.partialorder %v1593, 0.0
        %vm1636 = vcmp.ge.f32.partialorder %v1598, 0.0
        %vm1637 = vcmp.ge.f32.partialorder %v1601, 0.0
        %vm1638 = vcmp.ge.f32.partialorder %v1606, 0.0
        %vm1639 = vcmp.ge.f32.partialorder %v1609, 0.0
        %vm1640 = vcmp.ge.f32.partialorder %v1614, 0.0
        %vm1641 = vcmp.ge.f32.partialorder %v1617, 0.0
        %vm1642 = vcmp.ge.f32.partialorder %v1622, 0.0
        %vm1643 = vcmp.ge.f32.partialorder %v1625, 0.0
        %v1644 = vmul.f32 %v1566, 0.2
        %v1645 = vmul.f32 %v1569, 0.2
        %v1646 = vmul.f32 %v1574, 0.2
        %v1647 = vmul.f32 %v1577, 0.2
        %v1648 = vmul.f32 %v1582, 0.2
        %v1649 = vmul.f32 %v1585, 0.2
        %v1650 = vmul.f32 %v1590, 0.2
        %v1651 = vmul.f32 %v1593, 0.2
        %v1652 = vmul.f32 %v1598, 0.2
        %v1653 = vmul.f32 %v1601, 0.2
        %v1654 = vmul.f32 %v1606, 0.2
        %v1655 = vmul.f32 %v1609, 0.2
        %v1656 = vmul.f32 %v1614, 0.2
        %v1657 = vmul.f32 %v1617, 0.2
        %v1658 = vmul.f32 %v1622, 0.2
        %v1659 = vmul.f32 %v1625, 0.2
        %v1660 = vsel %vm1628, %v1566, %v1644
        %v1661 = vsel %vm1629, %v1569, %v1645
        %v1662 = vsel %vm1630, %v1574, %v1646
        %v1663 = vsel %vm1631, %v1577, %v1647
        %v1664 = vsel %vm1632, %v1582, %v1648
        %v1665 = vsel %vm1633, %v1585, %v1649
        %v1666 = vsel %vm1634, %v1590, %v1650
        %v1667 = vsel %vm1635, %v1593, %v1651
        %v1668 = vsel %vm1636, %v1598, %v1652
        %v1669 = vsel %vm1637, %v1601, %v1653
        %v1670 = vsel %vm1638, %v1606, %v1654
        %v1671 = vsel %vm1639, %v1609, %v1655
        %v1672 = vsel %vm1640, %v1614, %v1656
        %v1673 = vsel %vm1641, %v1617, %v1657
        %v1674 = vsel %vm1642, %v1622, %v1658
        %v1675 = vsel %vm1643, %v1625, %v1659
        %v1692 = vunpack.c.l.b16 %v1050
        %v1693 = vunpack.c.l.b16 %v1051
        %v1694 = vunpack.c.l.b16 %v1052
        %v1695 = vunpack.c.l.b16 %v1053
        %v1696 = vunpack.c.l.b16 %v1054
        %v1697 = vunpack.c.l.b16 %v1055
        %v1698 = vunpack.c.l.b16 %v1056
        %v1699 = vunpack.c.l.b16 %v1057
        %v1700 = vunpack.c.l.b16 %v1058
        %v1701 = vunpack.c.l.b16 %v1059
        %v1702 = vunpack.c.l.b16 %v1060
        %v1703 = vunpack.c.l.b16 %v1061
        %v1704 = vunpack.c.l.b16 %v1062
        %v1705 = vunpack.c.l.b16 %v1063
        %v1706 = vunpack.c.l.b16 %v1064
        %v1707 = vunpack.c.l.b16 %v1065
        %v1708 = vpack.c.b16 %v1693, %v1692
        %v1709 = vpack.c.b16 %v1695, %v1694
        %v1710 = vpack.c.b16 %v1697, %v1696
        %v1711 = vpack.c.b16 %v1699, %v1698
        %v1712 = vpack.c.b16 %v1701, %v1700
        %v1713 = vpack.c.b16 %v1703, %v1702
        %v1714 = vpack.c.b16 %v1705, %v1704
        %v1715 = vpack.c.b16 %v1707, %v1706
        %v1740 = vunpack.c.l.b16 %v1066
        %v1741 = vunpack.c.l.b16 %v1067
        %v1742 = vunpack.c.l.b16 %v1068
        %v1743 = vunpack.c.l.b16 %v1069
        %v1744 = vunpack.c.l.b16 %v1070
        %v1745 = vunpack.c.l.b16 %v1071
        %v1746 = vunpack.c.l.b16 %v1072
        %v1747 = vunpack.c.l.b16 %v1073
        %v1748 = vunpack.c.l.b16 %v1074
        %v1749 = vunpack.c.l.b16 %v1075
        %v1750 = vunpack.c.l.b16 %v1076
        %v1751 = vunpack.c.l.b16 %v1077
        %v1752 = vunpack.c.l.b16 %v1078
        %v1753 = vunpack.c.l.b16 %v1079
        %v1754 = vunpack.c.l.b16 %v1080
        %v1755 = vunpack.c.l.b16 %v1081
        %v1756 = vpack.c.b16 %v1741, %v1740
        %v1757 = vpack.c.b16 %v1743, %v1742
        %v1758 = vpack.c.b16 %v1745, %v1744
        %v1759 = vpack.c.b16 %v1747, %v1746
        %v1760 = vpack.c.b16 %v1749, %v1748
        %v1761 = vpack.c.b16 %v1751, %v1750
        %v1762 = vpack.c.b16 %v1753, %v1752
        %v1763 = vpack.c.b16 %v1755, %v1754
        %1772 = vmatprep.subr.bf16.mxu0 0
        %1773 = vmatpush1.bf16.msra.mxu0 %v1763
        %1774 = vmatprep.subr.bf16.mxu0 0
        %1775 = vmatpush1.bf16.msra.mxu0 %v1762
        %1776 = vmatprep.subr.bf16.mxu0 0
        %1777 = vmatpush1.bf16.msra.mxu0 %v1761
        %1778 = vmatprep.subr.bf16.mxu0 0
        %1779 = vmatpush1.bf16.msra.mxu0 %v1760
        %1780 = vmatprep.subr.bf16.mxu0 0
        %1781 = vmatpush1.bf16.msra.mxu0 %v1759
        %1782 = vmatprep.subr.bf16.mxu0 0
        %1783 = vmatpush1.bf16.msra.mxu0 %v1758
        %1784 = vmatprep.subr.bf16.mxu0 0
        %1785 = vmatpush1.bf16.msra.mxu0 %v1757
        %1786 = vmatprep.subr.bf16.mxu0 0
        %1787 = vmatpush1.bf16.msra.mxu0 %v1756
        %1788 = vmatprep.subr.bf16.mxu0 0
        %1789 = vmatpush2.bf16.msra.mxu0 0
        %1790 = vmatprep.subr.bf16.mxu0 0
        %1791 = vmatpush2.bf16.msra.mxu0 0
        %1792 = vmatprep.subr.bf16.mxu0 0
        %1793 = vmatpush2.bf16.msra.mxu0 0
        %1794 = vmatprep.subr.bf16.mxu0 0
        %1795 = vmatpush2.bf16.msra.mxu0 0
        %1796 = vmatprep.subr.bf16.mxu0 0
        %1797 = vmatpush2.bf16.msra.mxu0 0
        %1798 = vmatprep.subr.bf16.mxu0 0
        %1799 = vmatpush2.bf16.msra.mxu0 0
        %1800 = vmatprep.subr.bf16.mxu0 0
        %1801 = vmatpush2.bf16.msra.mxu0 0
        %1802 = vmatprep.subr.bf16.mxu0 0
        %1803 = vmatpush2.bf16.msra.mxu0 0
        %1804 = vmatprep.mubr.bf16.mxu0 0
        %1805 = vmatmul.mubr.bf16.gmra.mxu0 %v1708
        %v1806 = vpop.f32.mrf.mxu0
        %v1807 = vadd.f32 %v1660, %v1806
        %v1808 = vpop.f32.mrf.mxu0
        %v1809 = vpop.f32.mrf.mxu0
        %v1810 = vadd.f32 %v1661, %v1809
        %v1811 = vpop.f32.mrf.mxu0
        %1812 = vmatprep.mubr.bf16.mxu0 0
        %1813 = vmatmul.mubr.bf16.gmra.mxu0 %v1709
        %v1814 = vpop.f32.mrf.mxu0
        %v1815 = vadd.f32 %v1662, %v1814
        %v1816 = vpop.f32.mrf.mxu0
        %v1817 = vpop.f32.mrf.mxu0
        %v1818 = vadd.f32 %v1663, %v1817
        %v1819 = vpop.f32.mrf.mxu0
        %1820 = vmatprep.mubr.bf16.mxu0 0
        %1821 = vmatmul.mubr.bf16.gmra.mxu0 %v1710
        %v1822 = vpop.f32.mrf.mxu0
        %v1823 = vadd.f32 %v1664, %v1822
        %v1824 = vpop.f32.mrf.mxu0
        %v1825 = vpop.f32.mrf.mxu0
        %v1826 = vadd.f32 %v1665, %v1825
        %v1827 = vpop.f32.mrf.mxu0
        %1828 = vmatprep.mubr.bf16.mxu0 0
        %1829 = vmatmul.mubr.bf16.gmra.mxu0 %v1711
        %v1830 = vpop.f32.mrf.mxu0
        %v1831 = vadd.f32 %v1666, %v1830
        %v1832 = vpop.f32.mrf.mxu0
        %v1833 = vpop.f32.mrf.mxu0
        %v1834 = vadd.f32 %v1667, %v1833
        %v1835 = vpop.f32.mrf.mxu0
        %1836 = vmatprep.mubr.bf16.mxu0 0
        %1837 = vmatmul.mubr.bf16.gmra.mxu0 %v1712
        %v1838 = vpop.f32.mrf.mxu0
        %v1839 = vadd.f32 %v1668, %v1838
        %v1840 = vpop.f32.mrf.mxu0
        %v1841 = vpop.f32.mrf.mxu0
        %v1842 = vadd.f32 %v1669, %v1841
        %v1843 = vpop.f32.mrf.mxu0
        %1844 = vmatprep.mubr.bf16.mxu0 0
        %1845 = vmatmul.mubr.bf16.gmra.mxu0 %v1713
        %v1846 = vpop.f32.mrf.mxu0
        %v1847 = vadd.f32 %v1670, %v1846
        %v1848 = vpop.f32.mrf.mxu0
        %v1849 = vpop.f32.mrf.mxu0
        %v1850 = vadd.f32 %v1671, %v1849
        %v1851 = vpop.f32.mrf.mxu0
        %1852 = vmatprep.mubr.bf16.mxu0 0
        %1853 = vmatmul.mubr.bf16.gmra.mxu0 %v1714
        %v1854 = vpop.f32.mrf.mxu0
        %v1855 = vadd.f32 %v1672, %v1854
        %v1856 = vpop.f32.mrf.mxu0
        %v1857 = vpop.f32.mrf.mxu0
        %v1858 = vadd.f32 %v1673, %v1857
        %v1859 = vpop.f32.mrf.mxu0
        %1860 = vmatprep.mubr.bf16.mxu0 0
        %1861 = vmatmul.mubr.bf16.gmra.mxu0 %v1715
        %v1862 = vpop.f32.mrf.mxu0
        %v1863 = vadd.f32 %v1674, %v1862
        %v1864 = vpop.f32.mrf.mxu0
        %v1865 = vpop.f32.mrf.mxu0
        %v1866 = vadd.f32 %v1675, %v1865
        %v1867 = vpop.f32.mrf.mxu0
        %1868 = vdwg.mxu0
        %vm1869 = vcmp.ge.f32.partialorder %v1807, 0.0
        %vm1870 = vcmp.ge.f32.partialorder %v1810, 0.0
        %vm1871 = vcmp.ge.f32.partialorder %v1815, 0.0
        %vm1872 = vcmp.ge.f32.partialorder %v1818, 0.0
        %vm1873 = vcmp.ge.f32.partialorder %v1823, 0.0
        %vm1874 = vcmp.ge.f32.partialorder %v1826, 0.0
        %vm1875 = vcmp.ge.f32.partialorder %v1831, 0.0
        %vm1876 = vcmp.ge.f32.partialorder %v1834, 0.0
        %vm1877 = vcmp.ge.f32.partialorder %v1839, 0.0
        %vm1878 = vcmp.ge.f32.partialorder %v1842, 0.0
        %vm1879 = vcmp.ge.f32.partialorder %v1847, 0.0
        %vm1880 = vcmp.ge.f32.partialorder %v1850, 0.0
        %vm1881 = vcmp.ge.f32.partialorder %v1855, 0.0
        %vm1882 = vcmp.ge.f32.partialorder %v1858, 0.0
        %vm1883 = vcmp.ge.f32.partialorder %v1863, 0.0
        %vm1884 = vcmp.ge.f32.partialorder %v1866, 0.0
        %v1885 = vmul.f32 %v1807, 0.2
        %v1886 = vmul.f32 %v1810, 0.2
        %v1887 = vmul.f32 %v1815, 0.2
        %v1888 = vmul.f32 %v1818, 0.2
        %v1889 = vmul.f32 %v1823, 0.2
        %v1890 = vmul.f32 %v1826, 0.2
        %v1891 = vmul.f32 %v1831, 0.2
        %v1892 = vmul.f32 %v1834, 0.2
        %v1893 = vmul.f32 %v1839, 0.2
        %v1894 = vmul.f32 %v1842, 0.2
        %v1895 = vmul.f32 %v1847, 0.2
        %v1896 = vmul.f32 %v1850, 0.2
        %v1897 = vmul.f32 %v1855, 0.2
        %v1898 = vmul.f32 %v1858, 0.2
        %v1899 = vmul.f32 %v1863, 0.2
        %v1900 = vmul.f32 %v1866, 0.2
        %v1901 = vsel %vm1869, %v1807, %v1885
        %v1902 = vsel %vm1870, %v1810, %v1886
        %v1903 = vsel %vm1871, %v1815, %v1887
        %v1904 = vsel %vm1872, %v1818, %v1888
        %v1905 = vsel %vm1873, %v1823, %v1889
        %v1906 = vsel %vm1874, %v1826, %v1890
        %v1907 = vsel %vm1875, %v1831, %v1891
        %v1908 = vsel %vm1876, %v1834, %v1892
        %v1909 = vsel %vm1877, %v1839, %v1893
        %v1910 = vsel %vm1878, %v1842, %v1894
        %v1911 = vsel %vm1879, %v1847, %v1895
        %v1912 = vsel %vm1880, %v1850, %v1896
        %v1913 = vsel %vm1881, %v1855, %v1897
        %v1914 = vsel %vm1882, %v1858, %v1898
        %v1915 = vsel %vm1883, %v1863, %v1899
        %v1916 = vsel %vm1884, %v1866, %v1900
        %v1917 = vmul.f32 %v1901, %v1901
        %v1918 = vmul.f32 %v1902, %v1902
        %v1919 = vmul.f32 %v1903, %v1903
        %v1920 = vmul.f32 %v1904, %v1904
        %v1921 = vmul.f32 %v1905, %v1905
        %v1922 = vmul.f32 %v1906, %v1906
        %v1923 = vmul.f32 %v1907, %v1907
        %v1924 = vmul.f32 %v1908, %v1908
        %v1925 = vmul.f32 %v1909, %v1909
        %v1926 = vmul.f32 %v1910, %v1910
        %v1927 = vmul.f32 %v1911, %v1911
        %v1928 = vmul.f32 %v1912, %v1912
        %v1929 = vmul.f32 %v1913, %v1913
        %v1930 = vmul.f32 %v1914, %v1914
        %v1931 = vmul.f32 %v1915, %v1915
        %v1932 = vmul.f32 %v1916, %v1916
        %1933 = vadd.xlane.f32.xlu0 %v1917
        %v1934 = vpop.xlane.xlu0 %1933
        %1935 = vadd.xlane.f32.xlu0 %v1918
        %v1936 = vpop.xlane.xlu0 %1935
        %1937 = vadd.xlane.f32.xlu0 %v1919
        %v1938 = vpop.xlane.xlu0 %1937
        %1939 = vadd.xlane.f32.xlu0 %v1920
        %v1940 = vpop.xlane.xlu0 %1939
        %1941 = vadd.xlane.f32.xlu0 %v1921
        %v1942 = vpop.xlane.xlu0 %1941
        %1943 = vadd.xlane.f32.xlu0 %v1922
        %v1944 = vpop.xlane.xlu0 %1943
        %1945 = vadd.xlane.f32.xlu0 %v1923
        %v1946 = vpop.xlane.xlu0 %1945
        %1947 = vadd.xlane.f32.xlu0 %v1924
        %v1948 = vpop.xlane.xlu0 %1947
        %1949 = vadd.xlane.f32.xlu0 %v1925
        %v1950 = vpop.xlane.xlu0 %1949
        %1951 = vadd.xlane.f32.xlu0 %v1926
        %v1952 = vpop.xlane.xlu0 %1951
        %1953 = vadd.xlane.f32.xlu0 %v1927
        %v1954 = vpop.xlane.xlu0 %1953
        %1955 = vadd.xlane.f32.xlu0 %v1928
        %v1956 = vpop.xlane.xlu0 %1955
        %1957 = vadd.xlane.f32.xlu0 %v1929
        %v1958 = vpop.xlane.xlu0 %1957
        %1959 = vadd.xlane.f32.xlu0 %v1930
        %v1960 = vpop.xlane.xlu0 %1959
        %1961 = vadd.xlane.f32.xlu0 %v1931
        %v1962 = vpop.xlane.xlu0 %1961
        %1963 = vadd.xlane.f32.xlu0 %v1932
        %v1964 = vpop.xlane.xlu0 %1963
        %v1965 = vmax.f32 %v1934, 1e-24
        %v1966 = vmax.f32 %v1936, 1e-24
        %v1967 = vmax.f32 %v1938, 1e-24
        %v1968 = vmax.f32 %v1940, 1e-24
        %v1969 = vmax.f32 %v1942, 1e-24
        %v1970 = vmax.f32 %v1944, 1e-24
        %v1971 = vmax.f32 %v1946, 1e-24
        %v1972 = vmax.f32 %v1948, 1e-24
        %v1973 = vmax.f32 %v1950, 1e-24
        %v1974 = vmax.f32 %v1952, 1e-24
        %v1975 = vmax.f32 %v1954, 1e-24
        %v1976 = vmax.f32 %v1956, 1e-24
        %v1977 = vmax.f32 %v1958, 1e-24
        %v1978 = vmax.f32 %v1960, 1e-24
        %v1979 = vmax.f32 %v1962, 1e-24
        %v1980 = vmax.f32 %v1964, 1e-24
        %v1981 = vrsqrt.pop %v1965
        %v1982 = vrsqrt.pop %v1966
        %v1983 = vrsqrt.pop %v1967
        %v1984 = vrsqrt.pop %v1968
        %v1985 = vrsqrt.pop %v1969
        %v1986 = vrsqrt.pop %v1970
        %v1987 = vrsqrt.pop %v1971
        %v1988 = vrsqrt.pop %v1972
        %v1989 = vrsqrt.pop %v1973
        %v1990 = vrsqrt.pop %v1974
        %v1991 = vrsqrt.pop %v1975
        %v1992 = vrsqrt.pop %v1976
        %v1993 = vrsqrt.pop %v1977
        %v1994 = vrsqrt.pop %v1978
        %v1995 = vrsqrt.pop %v1979
        %v1996 = vrsqrt.pop %v1980
        %v1997 = vmul.f32 %v1901, %v1981
        %v1998 = vmul.f32 %v1902, %v1982
        %v1999 = vmul.f32 %v1903, %v1983
        %v2000 = vmul.f32 %v1904, %v1984
        %v2001 = vmul.f32 %v1905, %v1985
        %v2002 = vmul.f32 %v1906, %v1986
        %v2003 = vmul.f32 %v1907, %v1987
        %v2004 = vmul.f32 %v1908, %v1988
        %v2005 = vmul.f32 %v1909, %v1989
        %v2006 = vmul.f32 %v1910, %v1990
        %v2007 = vmul.f32 %v1911, %v1991
        %v2008 = vmul.f32 %v1912, %v1992
        %v2009 = vmul.f32 %v1913, %v1993
        %v2010 = vmul.f32 %v1914, %v1994
        %v2011 = vmul.f32 %v1915, %v1995
        %v2012 = vmul.f32 %v1916, %v1996
        %2013 = vst [vmem:[%s324] sm:$0xff] %v1997
        %2014 = vst [vmem:[%s324 + $0x8] sm:$0xff] %v1998
        %2015 = vst [vmem:[%s324 + $0x10] sm:$0xff] %v1999
        %2016 = vst [vmem:[%s324 + $0x18] sm:$0xff] %v2000
        %2017 = vst [vmem:[%s324 + $0x20] sm:$0xff] %v2001
        %2018 = vst [vmem:[%s324 + $0x28] sm:$0xff] %v2002
        %2019 = vst [vmem:[%s324 + $0x30] sm:$0xff] %v2003
        %2020 = vst [vmem:[%s324 + $0x38] sm:$0xff] %v2004
        %2021 = vst [vmem:[%s324 + $0x40] sm:$0xff] %v2005
        %2022 = vst [vmem:[%s324 + $0x48] sm:$0xff] %v2006
        %2023 = vst [vmem:[%s324 + $0x50] sm:$0xff] %v2007
        %2024 = vst [vmem:[%s324 + $0x58] sm:$0xff] %v2008
        %2025 = vst [vmem:[%s324 + $0x60] sm:$0xff] %v2009
        %2026 = vst [vmem:[%s324 + $0x68] sm:$0xff] %v2010
        %2027 = vst [vmem:[%s324 + $0x70] sm:$0xff] %v2011
        %2028 = vst [vmem:[%s324 + $0x78] sm:$0xff] %v2012
        %s2029 = sand.u32 %s147, 1
        %s2030 = scalar_lea.sflag [#allocation5], %s2029
        %s2031 = sand.u32 %s147, 1
        %s2032 = smul.addr %s2031, 128
        %s2033 = scalar_lea.vmem [#allocation12], %s2032
        // Predicated region
        $region61: #{tpu_custom_call.1} parent=39 // pred_check
          %p2034 = pneg %p157
        $region62: #{tpu_custom_call.1} parent=39 // pred_check_branch
          %2036 = sbr.rel (%p2034) target = $region64
        $region63: #{tpu_custom_call.1} parent=39 // pred_region
          %s2037 = smul.u32 16, %s24
          %s2039 = ssub.s32 2048, 2048
          %2040 = vsyncadd %s2030, %s2039
          %s2041 = smul.addr %s2037, 128
          %s2042 = scalar_lea.hbm %s5, %s2041
          %s2043 = sshll.u32 %s2033, 4
          %s2044 = int_to_ptr.vmem [resolvable:$true] %s2043
          %2049 = dma.vmem_to_hbm [thread:$0]  %s2044, 2048, %s2042, %s2030, 128, 128, 8
        $region64: #{tpu_custom_call.1} parent=39 // pred_fallthru
          _
      $region40: #{tpu_custom_call.1} parent=5 // pred_fallthru
        _
      %p2050 = scmp.le.s32.totalorder 2, %s19
      // Predicated region
      $region65: #{tpu_custom_call.1} parent=5 // pred_check
        %p2051 = pneg %p2050
      $region66: #{tpu_custom_call.1} parent=5 // pred_check_branch
        %2053 = sbr.rel (%p2051) target = $region68
      $region67: #{tpu_custom_call.1} parent=5 // pred_region
        %s2054 = ssub.s32 %s19, 2
        // Predicated region
        $region69: #{tpu_custom_call.1} parent=67 // pred_check
          %p2055 = pneg %p163
        $region70: #{tpu_custom_call.1} parent=67 // pred_check_branch
          %2057 = sbr.rel (%p2055) target = $region72
        $region71: #{tpu_custom_call.1} parent=67 // pred_region
          %s2058 = sand.u32 %s148, 1
          %s2059 = scalar_lea.sflag [#allocation5], %s2058
          %s2060 = sand.u32 %s148, 1
          %s2061 = smul.addr %s2060, 128
          %s2062 = scalar_lea.vmem [#allocation12], %s2061
          %2063 = dma.done %s2059, 2048
        $region72: #{tpu_custom_call.1} parent=67 // pred_fallthru
          _
      $region68: #{tpu_custom_call.1} parent=5 // pred_fallthru
        _
    $region6: #{tpu_custom_call.1} parent=1 // loop_footer
      %s23 = sadd.s32 1, %s19
    $region7: #{tpu_custom_call.1} parent=1 // loop_footer_branch
      %18 = sbr.rel target = $region3
    $region8: #{tpu_custom_call.1} parent=1 // loop_exit
      _
    %2064 = vsyncpa [#allocation4], 1
    %s2065 = scalar_lea.sflag [#allocation4], 1
    %2066 = vsyncpa %s2065, 1
    %2067 = vsyncpa [#allocation7], 1
    %2068 = vsyncpa [#allocation10], 1
    %2069 = vsyncpa [#allocation5], 1
    %s2070 = scalar_lea.sflag [#allocation5], 1
    %2071 = vsyncpa %s2070, 1

</llo_original>
